<compile_context>
chip_gen: v7x
topology: tpu7x:2x2x1
jax: 0.10.0
libtpu: 0.0.40
codegen_flags: <defaults>
</compile_context>

<pallas_src>
import functools

import jax
import jax.numpy as jnp
from jax.experimental import pallas as pl
from jax.experimental.pallas import tpu as pltpu


_BUDGET_BYTES = 32 * 1024 * 1024      # per-step double-buffered working-set budget


# ----------------------------------------------------------------------------
# Primary single-pass kernel: whole (TB, C, HW) tile resident in VMEM.
# ----------------------------------------------------------------------------
def channel_gate_kernel(x_ref, w1_ref, b1_ref, w2_ref, b2_ref, o_ref, *,
                        hw, chunk, n_chunks):
    # x_ref: (TB, C, HW)   w1_ref: (C, Cr)   b1_ref: (1, Cr)
    # w2_ref: (Cr, C)      b2_ref: (1, C)    o_ref: (TB, C, HW)
    tb = x_ref.shape[0]
    c = x_ref.shape[1]

    # ---- fused single-pass sum + max over the flattened spatial axis -------
    # One chunked sweep over the VMEM tile maintains both running sum and
    # running max (pooling phase reads the tile once instead of twice).
    def body(i, carry):
        s, m = carry
        start = i * chunk
        if chunk % 128 == 0:
            start = pl.multiple_of(start, 128)   # lane-aligned dynamic slice
        xc = x_ref[:, :, pl.ds(start, chunk)]
        s = s + jnp.sum(xc, axis=-1)
        m = jnp.maximum(m, jnp.max(xc, axis=-1))
        return s, m

    init = (jnp.zeros((tb, c), jnp.float32),
            jnp.full((tb, c), -jnp.inf, dtype=jnp.float32))
    s, m = jax.lax.fori_loop(0, n_chunks, body, init,
                             unroll=(n_chunks <= 8))
    avg_pool = s * jnp.float32(1.0 / hw)          # (TB, C)
    max_pool = m                                  # (TB, C)

    # ---- shared MLP: avg/max branches batched into one matmul pair ---------
    p = jnp.concatenate([avg_pool, max_pool], axis=0)        # (2*TB, C)
    h = jnp.dot(p, w1_ref[...],
                precision=jax.lax.Precision.HIGHEST,
                preferred_element_type=jnp.float32) + b1_ref[...]
    h = jnp.maximum(h, 0.0)                                   # ReLU
    att2 = jnp.dot(h, w2_ref[...],
                   precision=jax.lax.Precision.HIGHEST,
                   preferred_element_type=jnp.float32) + b2_ref[...]
    att = att2[:tb] + att2[tb:]                               # (TB, C)

    scale = jax.nn.sigmoid(att)                               # EUP path

    # Broadcast once and scale the whole tile (lane-dense store, HW % 128 == 0
    # or HW == full dim).
    o_ref[...] = (x_ref[...] * scale[:, :, None]).astype(o_ref.dtype)


# ----------------------------------------------------------------------------
# Fallback two-pass kernels (huge C*HW: tile the spatial axis).
# ----------------------------------------------------------------------------
def pool_mlp_kernel(x_ref, w1_ref, b1_ref, w2_ref, b2_ref, scale_ref,
                    s_acc, m_acc, *, hw):
    # x_ref: (TB, C, THW)   scale_ref: (TB, 1, C)   s_acc/m_acc: (TB, C)
    h_idx = pl.program_id(1)
    tb = x_ref.shape[0]

    @pl.when(h_idx == 0)
    def _():
        s_acc[...] = jnp.zeros_like(s_acc)
        m_acc[...] = jnp.full_like(m_acc, -jnp.inf)

    x = x_ref[...]
    s_acc[...] = s_acc[...] + jnp.sum(x, axis=-1)
    m_acc[...] = jnp.maximum(m_acc[...], jnp.max(x, axis=-1))

    @pl.when(h_idx == pl.num_programs(1) - 1)
    def _():
        avg_pool = s_acc[...] * jnp.float32(1.0 / hw)          # (TB, C)
        max_pool = m_acc[...]
        p = jnp.concatenate([avg_pool, max_pool], axis=0)      # (2*TB, C)
        hdn = jnp.dot(p, w1_ref[...],
                      precision=jax.lax.Precision.HIGHEST,
                      preferred_element_type=jnp.float32) + b1_ref[...]
        hdn = jnp.maximum(hdn, 0.0)
        att2 = jnp.dot(hdn, w2_ref[...],
                       precision=jax.lax.Precision.HIGHEST,
                       preferred_element_type=jnp.float32) + b2_ref[...]
        att = att2[:tb] + att2[tb:]                            # (TB, C)
        scale_ref[...] = jax.nn.sigmoid(att)[:, None, :]       # (TB, 1, C)


def scale_apply_kernel(x_ref, scale_ref, o_ref):
    # x_ref/o_ref: (TB, C, THW)   scale_ref: (TB, 1, C)
    s = scale_ref[...][:, 0, :]                                # (TB, C)
    o_ref[...] = (x_ref[...] * s[:, :, None]).astype(o_ref.dtype)


# ----------------------------------------------------------------------------
# Tiling heuristics
# ----------------------------------------------------------------------------
def _divisors(n):
    return [d for d in range(1, n + 1) if n % d == 0]


def _pick_tb(B, C, HW, budget_bytes=_BUDGET_BYTES, elem_bytes=4):
    """Largest batch-tile keeping the double-buffered in+out slabs under budget,
    preferring >= 2 grid steps so the DMA pipeline actually overlaps.
    Returns None if even TB=1 overflows (caller falls back to two-pass)."""
    per_b = C * HW * elem_bytes

    def fits(tb):
        # in + out blocks, each double-buffered -> 4x the per-block bytes.
        return 4 * tb * per_b <= budget_bytes

    divs = _divisors(B)
    cands = [d for d in divs if d <= max(1, B // 2) and fits(d)]
    if cands:
        return max(cands)
    cands = [d for d in divs if fits(d)]
    if cands:
        return max(cands)
    return None


def _pick_chunk(hw, max_chunk=1024):
    """Chunk length for the fused sum/max sweep: prefer a 128-lane-aligned
    divisor of HW; otherwise do a single full-width pass."""
    if hw <= max_chunk:
        return hw
    for cand in range(max_chunk - (max_chunk % 128), 127, -128):
        if hw % cand == 0:
            return cand
    return hw


def _pick_hw_tile(C, HW, budget_bytes=_BUDGET_BYTES, elem_bytes=4):
    """Largest 128-multiple divisor of HW whose (1, C, thw) block (double-
    buffered in + out) fits the budget. None if no such divisor exists."""
    best = None
    for thw in range(128, HW + 1, 128):
        if HW % thw != 0:
            continue
        if 4 * C * thw * elem_bytes <= budget_bytes:
            best = thw
    return best


def _vmem_limit(block_bytes):
    return int(min(48 * 1024 * 1024, max(block_bytes + (4 << 20), 16 << 20)))


# ----------------------------------------------------------------------------
# Wrapper
# ----------------------------------------------------------------------------
def channel_gate(x, w1, b1, w2, b2, *, force_two_pass=False, hw_tile=None):
    """x: (B, C, H, W) f32; weights laid out as (in, out) so kernels do p @ W + b."""
    B, C, H, W = x.shape
    HW = H * W
    xf = x.reshape(B, C, HW)

    tb = _pick_tb(B, C, HW)
    use_two_pass = force_two_pass or tb is None

    weight_specs = [
        pl.BlockSpec(w1.shape, lambda *idx: (0, 0)),
        pl.BlockSpec(b1.shape, lambda *idx: (0, 0)),
        pl.BlockSpec(w2.shape, lambda *idx: (0, 0)),
        pl.BlockSpec(b2.shape, lambda *idx: (0, 0)),
    ]

    if not use_two_pass:
        # ---- single-pass fused path (x read once, written once) ------------
        chunk = _pick_chunk(HW)
        assert HW % chunk == 0
        n_chunks = HW // chunk
        vmem_limit = _vmem_limit(4 * tb * C * HW * 4)

        kernel = functools.partial(channel_gate_kernel,
                                   hw=HW, chunk=chunk, n_chunks=n_chunks)
        out_flat = pl.pallas_call(
            kernel,
            out_shape=jax.ShapeDtypeStruct((B, C, HW), x.dtype),
            grid=(B // tb,),
            in_specs=[pl.BlockSpec((tb, C, HW), lambda i: (i, 0, 0))] + weight_specs,
            out_specs=pl.BlockSpec((tb, C, HW), lambda i: (i, 0, 0)),
            compiler_params=pltpu.CompilerParams(
                dimension_semantics=("parallel",),
                vmem_limit_bytes=vmem_limit),
        )(xf, w1, b1, w2, b2)
        return out_flat.reshape(B, C, H, W)

    # ---- two-pass fallback: tile HW, accumulate pools across it ------------
    thw = hw_tile if hw_tile is not None else _pick_hw_tile(C, HW)
    if thw is None or HW % thw != 0:
        # TODO(synk): HW has no 128-multiple divisor; use a full-width block.
        thw = HW
    tbp = _pick_tb(B, C, thw) or 1
    n_b, n_hw = B // tbp, HW // thw
    vmem_limit = _vmem_limit(4 * tbp * C * thw * 4)

    # Pass 1: pooled sum/max accumulated over HW tiles -> MLP -> sigmoid scale.
    scale = pl.pallas_call(
        functools.partial(pool_mlp_kernel, hw=HW),
        out_shape=jax.ShapeDtypeStruct((B, 1, C), jnp.float32),
        grid=(n_b, n_hw),
        in_specs=[pl.BlockSpec((tbp, C, thw), lambda b, h: (b, 0, h))] + weight_specs,
        out_specs=pl.BlockSpec((tbp, 1, C), lambda b, h: (b, 0, 0)),
        scratch_shapes=[pltpu.VMEM((tbp, C), jnp.float32),
                        pltpu.VMEM((tbp, C), jnp.float32)],
        compiler_params=pltpu.CompilerParams(
            dimension_semantics=("parallel", "arbitrary"),
            vmem_limit_bytes=vmem_limit),
    )(xf, w1, b1, w2, b2)

    # Pass 2: apply the per-(B, C) scale, lane-dense HW-tiled output blocks.
    out_flat = pl.pallas_call(
        scale_apply_kernel,
        out_shape=jax.ShapeDtypeStruct((B, C, HW), x.dtype),
        grid=(n_b, n_hw),
        in_specs=[
            pl.BlockSpec((tbp, C, thw), lambda b, h: (b, 0, h)),
            pl.BlockSpec((tbp, 1, C), lambda b, h: (b, 0, 0)),
        ],
        out_specs=pl.BlockSpec((tbp, C, thw), lambda b, h: (b, 0, h)),
        compiler_params=pltpu.CompilerParams(
            dimension_semantics=("parallel", "parallel"),
            vmem_limit_bytes=vmem_limit),
    )(xf, scale)
    return out_flat.reshape(B, C, H, W)


# ----------------------------------------------------------------------------
# Pure-JAX reference
# ----------------------------------------------------------------------------
def reference(x, w1, b1, w2, b2):
    B, C, H, W = x.shape
    xf = x.reshape(B, C, H * W)
    avg_p = xf.mean(axis=-1)
    max_p = xf.max(axis=-1)

    def mlp(p):
        h = jnp.dot(p, w1, precision=jax.lax.Precision.HIGHEST) + b1
        h = jnp.maximum(h, 0.0)
        return jnp.dot(h, w2, precision=jax.lax.Precision.HIGHEST) + b2

    att = mlp(avg_p) + mlp(max_p)
    scale = jax.nn.sigmoid(att)
    return x * scale[:, :, None, None]


if __name__ == "__main__":
    key = jax.random.PRNGKey(0)
    B, C, H, W = 4, 32, 48, 48           # HW=2304 -> chunked fused reduction (chunk=768)
    reduction_ratio = 16
    Cr = C // reduction_ratio            # 2

    k_x, k_w1, k_b1, k_w2, k_b2 = jax.random.split(key, 5)
    x = jax.random.normal(k_x, (B, C, H, W), dtype=jnp.float32)

    # Synthetic parameters for nn.Linear(C, Cr) then nn.Linear(Cr, C),
    # stored as (in_features, out_features) so kernels compute p @ W + b.
    w1 = 0.1 * jax.random.normal(k_w1, (C, Cr), dtype=jnp.float32)
    b1 = 0.1 * jax.random.normal(k_b1, (1, Cr), dtype=jnp.float32)
    w2 = 0.1 * jax.random.normal(k_w2, (Cr, C), dtype=jnp.float32)
    b2 = 0.1 * jax.random.normal(k_b2, (1, C), dtype=jnp.float32)

    ref = reference(x, w1, b1, w2, b2)

    # Primary single-pass path.
    out = jax.block_until_ready(channel_gate(x, w1, b1, w2, b2))
    assert out.shape == (B, C, H, W)
    assert jnp.allclose(out, ref, atol=1e-5, rtol=1e-5), "single-pass mismatch"

    # Two-pass fallback path (forced, HW tiled into 3 blocks of 768) — keeps
    # the large-HW fallback exercised and validated, not dead code.
    out2 = jax.block_until_ready(
        channel_gate(x, w1, b1, w2, b2, force_two_pass=True, hw_tile=768))
    assert jnp.allclose(out2, ref, atol=1e-5, rtol=1e-5), "two-pass mismatch"

    print("KERNEL_OK")
</pallas_src>

<mosaic_0001>
module attributes {stable_mosaic.version = 11 : i64} {
  func.func @channel_gate_kernel(%arg0: i32, %arg1: memref<2x32x2304xf32, #tpu.memory_space<vmem>>, %arg2: memref<32x2xf32, #tpu.memory_space<vmem>>, %arg3: memref<1x2xf32, #tpu.memory_space<vmem>>, %arg4: memref<2x32xf32, #tpu.memory_space<vmem>>, %arg5: memref<1x32xf32, #tpu.memory_space<vmem>>, %arg6: memref<2x32x2304xf32, #tpu.memory_space<vmem>>) attributes {dimension_semantics = [#tpu.dimension_semantics<parallel>], iteration_bounds = array<i64: 2>, scalar_prefetch = 0 : i64, scratch_operands = 0 : i64, tpu.core_type = #tpu.core_type<tc>, window_params = [{transform_indices = @transform_0, window_bounds = array<i64: 2, 32, 2304>}, {pipeline_mode = #tpu.pipeline_mode<synchronous>, transform_indices = @transform_1, window_bounds = array<i64: 32, 2>}, {pipeline_mode = #tpu.pipeline_mode<synchronous>, transform_indices = @transform_2, window_bounds = array<i64: 1, 2>}, {pipeline_mode = #tpu.pipeline_mode<synchronous>, transform_indices = @transform_3, window_bounds = array<i64: 2, 32>}, {pipeline_mode = #tpu.pipeline_mode<synchronous>, transform_indices = @transform_4, window_bounds = array<i64: 1, 32>}, {transform_indices = @transform_5, window_bounds = array<i64: 2, 32, 2304>}]} {
    %cst = arith.constant 0.000000e+00 : f32
    %0 = vector.broadcast %cst : f32 to vector<2x32xf32>
    %cst_0 = arith.constant 0xFF800000 : f32
    %1 = vector.broadcast %cst_0 : f32 to vector<2x32xf32>
    %c0_i32 = arith.constant 0 : i32
    %c768_i32 = arith.constant 768 : i32
    %2 = arith.muli %c0_i32, %c768_i32 : i32
    %3 = tpu.assume_multiple %2, 128 : i32
    %c0 = arith.constant 0 : index
    %c0_1 = arith.constant 0 : index
    %4 = arith.index_cast %3 : i32 to index
    %5 = vector.load %arg1[%c0, %c0_1, %4] : memref<2x32x2304xf32, #tpu.memory_space<vmem>>, vector<2x32x768xf32>
    %cst_2 = arith.constant dense<0.000000e+00> : vector<2x32xf32>
    %6 = vector.multi_reduction <add>, %5, %cst_2 [2] : vector<2x32x768xf32> to vector<2x32xf32>
    %7 = arith.addf %0, %6 : vector<2x32xf32>
    %cst_3 = arith.constant dense<0xFF800000> : vector<2x32xf32>
    %8 = vector.multi_reduction <maximumf>, %5, %cst_3 [2] : vector<2x32x768xf32> to vector<2x32xf32>
    %9 = arith.maximumf %1, %8 : vector<2x32xf32>
    %c1_i32 = arith.constant 1 : i32
    %c768_i32_4 = arith.constant 768 : i32
    %10 = arith.muli %c1_i32, %c768_i32_4 : i32
    %11 = tpu.assume_multiple %10, 128 : i32
    %c0_5 = arith.constant 0 : index
    %c0_6 = arith.constant 0 : index
    %12 = arith.index_cast %11 : i32 to index
    %13 = vector.load %arg1[%c0_5, %c0_6, %12] : memref<2x32x2304xf32, #tpu.memory_space<vmem>>, vector<2x32x768xf32>
    %cst_7 = arith.constant dense<0.000000e+00> : vector<2x32xf32>
    %14 = vector.multi_reduction <add>, %13, %cst_7 [2] : vector<2x32x768xf32> to vector<2x32xf32>
    %15 = arith.addf %7, %14 : vector<2x32xf32>
    %cst_8 = arith.constant dense<0xFF800000> : vector<2x32xf32>
    %16 = vector.multi_reduction <maximumf>, %13, %cst_8 [2] : vector<2x32x768xf32> to vector<2x32xf32>
    %17 = arith.maximumf %9, %16 : vector<2x32xf32>
    %c2_i32 = arith.constant 2 : i32
    %c768_i32_9 = arith.constant 768 : i32
    %18 = arith.muli %c2_i32, %c768_i32_9 : i32
    %19 = tpu.assume_multiple %18, 128 : i32
    %c0_10 = arith.constant 0 : index
    %c0_11 = arith.constant 0 : index
    %20 = arith.index_cast %19 : i32 to index
    %21 = vector.load %arg1[%c0_10, %c0_11, %20] : memref<2x32x2304xf32, #tpu.memory_space<vmem>>, vector<2x32x768xf32>
    %cst_12 = arith.constant dense<0.000000e+00> : vector<2x32xf32>
    %22 = vector.multi_reduction <add>, %21, %cst_12 [2] : vector<2x32x768xf32> to vector<2x32xf32>
    %23 = arith.addf %15, %22 : vector<2x32xf32>
    %cst_13 = arith.constant dense<0xFF800000> : vector<2x32xf32>
    %24 = vector.multi_reduction <maximumf>, %21, %cst_13 [2] : vector<2x32x768xf32> to vector<2x32xf32>
    %25 = arith.maximumf %17, %24 : vector<2x32xf32>
    %c3_i32 = arith.constant 3 : i32
    %cst_14 = arith.constant 4.34027781E-4 : f32
    %26 = vector.broadcast %cst_14 : f32 to vector<2x32xf32>
    %27 = arith.mulf %23, %26 : vector<2x32xf32>
    %28 = tpu.concatenate %27, %25 in 0 : vector<2x32xf32>, vector<2x32xf32> -> vector<4x32xf32>
    %c0_15 = arith.constant 0 : index
    %c0_16 = arith.constant 0 : index
    %29 = vector.load %arg2[%c0_15, %c0_16] : memref<32x2xf32, #tpu.memory_space<vmem>>, vector<32x2xf32>
    %cst_17 = arith.constant dense<0.000000e+00> : vector<4x2xf32>
    %30 = tpu.matmul %28, %29, %cst_17 {dimension_numbers = #tpu.dot_dimension_numbers<[1], [0], [0], [1], [0, 0, 1, 1], [], []>, precision = #tpu.contract_precision<fp32>} : vector<4x32xf32>, vector<32x2xf32>, vector<4x2xf32> -> vector<4x2xf32>
    %c0_18 = arith.constant 0 : index
    %c0_19 = arith.constant 0 : index
    %31 = vector.load %arg3[%c0_18, %c0_19] : memref<1x2xf32, #tpu.memory_space<vmem>>, vector<1x2xf32>
    %32 = vector.broadcast %31 : vector<1x2xf32> to vector<4x2xf32>
    %33 = arith.addf %30, %32 : vector<4x2xf32>
    %cst_20 = arith.constant 0.000000e+00 : f32
    %34 = vector.broadcast %cst_20 : f32 to vector<4x2xf32>
    %35 = arith.maximumf %33, %34 : vector<4x2xf32>
    %c0_21 = arith.constant 0 : index
    %c0_22 = arith.constant 0 : index
    %36 = vector.load %arg4[%c0_21, %c0_22] : memref<2x32xf32, #tpu.memory_space<vmem>>, vector<2x32xf32>
    %cst_23 = arith.constant dense<0.000000e+00> : vector<4x32xf32>
    %37 = tpu.matmul %35, %36, %cst_23 {dimension_numbers = #tpu.dot_dimension_numbers<[1], [0], [0], [1], [0, 0, 1, 1], [], []>, precision = #tpu.contract_precision<fp32>} : vector<4x2xf32>, vector<2x32xf32>, vector<4x32xf32> -> vector<4x32xf32>
    %c0_24 = arith.constant 0 : index
    %c0_25 = arith.constant 0 : index
    %38 = vector.load %arg5[%c0_24, %c0_25] : memref<1x32xf32, #tpu.memory_space<vmem>>, vector<1x32xf32>
    %39 = vector.broadcast %38 : vector<1x32xf32> to vector<4x32xf32>
    %40 = arith.addf %37, %39 : vector<4x32xf32>
    %41 = vector.extract_strided_slice %40 {offsets = [0, 0], sizes = [2, 32], strides = [1, 1]} : vector<4x32xf32> to vector<2x32xf32>
    %42 = vector.extract_strided_slice %40 {offsets = [2, 0], sizes = [2, 32], strides = [1, 1]} : vector<4x32xf32> to vector<2x32xf32>
    %43 = arith.addf %41, %42 : vector<2x32xf32>
    %44 = arith.negf %43 : vector<2x32xf32>
    %45 = math.exp %44 : vector<2x32xf32>
    %cst_26 = arith.constant 1.000000e+00 : f32
    %46 = vector.broadcast %cst_26 : f32 to vector<2x32xf32>
    %47 = arith.addf %46, %45 : vector<2x32xf32>
    %48 = arith.divf %46, %47 : vector<2x32xf32>
    %c0_27 = arith.constant 0 : index
    %c0_28 = arith.constant 0 : index
    %c0_29 = arith.constant 0 : index
    %49 = vector.load %arg1[%c0_27, %c0_28, %c0_29] : memref<2x32x2304xf32, #tpu.memory_space<vmem>>, vector<2x32x2304xf32>
    %50 = vector.shape_cast %48 : vector<2x32xf32> to vector<2x32x1xf32>
    %51 = vector.broadcast %50 : vector<2x32x1xf32> to vector<2x32x2304xf32>
    %52 = arith.mulf %49, %51 : vector<2x32x2304xf32>
    %c0_30 = arith.constant 0 : index
    %c0_31 = arith.constant 0 : index
    %c0_32 = arith.constant 0 : index
    %53 = vector.load %arg6[%c0_30, %c0_31, %c0_32] : memref<2x32x2304xf32, #tpu.memory_space<vmem>>, vector<2x32x2304xf32>
    tpu.vector_store %arg6[%c0_30, %c0_31, %c0_32], %52 {strides = array<i32>} : memref<2x32x2304xf32, #tpu.memory_space<vmem>>, vector<2x32x2304xf32>,
    return
  }
  func.func @transform_0(%arg0: i32) -> (i32, i32, i32) {
    %c0_i32 = arith.constant 0 : i32
    %c0_i32_0 = arith.constant 0 : i32
    %c0_i32_1 = arith.constant 0 : i32
    return %arg0, %c0_i32, %c0_i32_0 : i32, i32, i32
  }
  func.func @transform_1(%arg0: i32) -> (i32, i32) {
    %c0_i32 = arith.constant 0 : i32
    %c0_i32_0 = arith.constant 0 : i32
    %c0_i32_1 = arith.constant 0 : i32
    return %c0_i32, %c0_i32_0 : i32, i32
  }
  func.func @transform_2(%arg0: i32) -> (i32, i32) {
    %c0_i32 = arith.constant 0 : i32
    %c0_i32_0 = arith.constant 0 : i32
    %c0_i32_1 = arith.constant 0 : i32
    return %c0_i32, %c0_i32_0 : i32, i32
  }
  func.func @transform_3(%arg0: i32) -> (i32, i32) {
    %c0_i32 = arith.constant 0 : i32
    %c0_i32_0 = arith.constant 0 : i32
    %c0_i32_1 = arith.constant 0 : i32
    return %c0_i32, %c0_i32_0 : i32, i32
  }
  func.func @transform_4(%arg0: i32) -> (i32, i32) {
    %c0_i32 = arith.constant 0 : i32
    %c0_i32_0 = arith.constant 0 : i32
    %c0_i32_1 = arith.constant 0 : i32
    return %c0_i32, %c0_i32_0 : i32, i32
  }
  func.func @transform_5(%arg0: i32) -> (i32, i32, i32) {
    %c0_i32 = arith.constant 0 : i32
    %c0_i32_0 = arith.constant 0 : i32
    %c0_i32_1 = arith.constant 0 : i32
    return %arg0, %c0_i32, %c0_i32_0 : i32, i32, i32
  }
}

</mosaic_0001>

<llo_original>
// kernel: tpu_custom_call.1
$region0: #{tpu_custom_call.1}
  #allocation0 [shape = 'u32[]', space=smem, size = 0x4, offset = 0x4, fixed_abs, tag = 'smem constant byte address 0x4 - core index']
  #allocation1 [shape = 'u32[144,128]{1,0:T(1,128)}', space=vmem, size = 0x12000, scoped, tag = 'internal scratch']
  %s0 = inlined_call_operand.hbm [shape: f32[4,32,2304], index: 0, kind: input, shape index: {}]
  %s1 = inlined_call_operand.vmem [shape: f32[32,2], index: 1, kind: input, shape index: {}]
  %s2 = inlined_call_operand.hbm [shape: f32[1,2], index: 2, kind: input, shape index: {}]
  %s3 = inlined_call_operand.hbm [shape: f32[2,32], index: 3, kind: input, shape index: {}]
  %s4 = inlined_call_operand.hbm [shape: f32[1,32], index: 4, kind: input, shape index: {}]
  %s5 = inlined_call_operand.hbm [shape: f32[4,32,2304], index: 5, kind: output, shape index: {}]
  %s6 = sld [smem:[#allocation0]]
  $region69: #{tpu_custom_call.1} parent=0
    _
  %s8 = ssub.s32 1, %s6
  %s9 = scalar_select 0, %s8, %s6
  $region1: #{tpu_custom_call.1} parent=0
    #allocation2 [shape = 'u8[1179648]{0}', space=vmem, size = 0x120000, scoped, tag = 'input window, operand 0']
    #allocation3 [shape = 's32[2]{0}', space=sflag, size = 0x8, scoped, tag = 'scoped memory for tpu_custom_call.1']
    #allocation4 [shape = 's32[2]{0}', space=sflag, size = 0x8, scoped, tag = 'scoped memory for tpu_custom_call.1']
    #allocation5 [shape = 'u8[512]{0}', space=vmem, size = 0x400, scoped, tag = 'input window, operand 2, single buffered']
    #allocation6 [shape = 's32[1]{0}', space=sflag, size = 0x4, scoped, tag = 'scoped memory for tpu_custom_call.1']
    #allocation7 [shape = 'u8[1024]{0}', space=vmem, size = 0x400, scoped, tag = 'input window, operand 3, single buffered']
    #allocation8 [shape = 'u8[512]{0}', space=vmem, size = 0x400, scoped, tag = 'input window, operand 4, single buffered']
    #allocation9 [shape = 's32[1]{0}', space=sflag, size = 0x4, scoped, tag = 'scoped memory for tpu_custom_call.1']
    #allocation10 [shape = 'u8[1179648]{0}', space=vmem, size = 0x120000, scoped, tag = 'output window, operand 0']
    %10 = vsyncpa [#allocation3], 0
    %s11 = scalar_lea.sflag [#allocation3], 1
    %12 = vsyncpa %s11, 0
    %13 = vsyncpa [#allocation6], 0
    %14 = vsyncpa [#allocation9], 0
    %15 = vsyncpa [#allocation4], 0
    %s16 = scalar_lea.sflag [#allocation4], 1
    %17 = vsyncpa %s16, 0
    loop: start=0, step=1, limit=4
    $region2: #{tpu_custom_call.1} parent=1 // loop_pre_header
      _
    $region3: #{tpu_custom_call.1} parent=1 // loop_header
      %s19 = sphi 0, %s23
      %p20 = scmp.ge.s32.totalorder %s19, 4
      %s29 = sphi 0, %s31
      %s32 = sphi 0, %s29
      %s33 = sphi 0, %s32
      %s49 = sphi 0, %s33
      %s53 = sphi 0, %s53
      %s55 = sphi 0, %s53
      %s56 = sphi 0, %s55
      %s70 = sphi 0, %s56
      %s74 = sphi 0, %s74
      %s76 = sphi 0, %s74
      %s77 = sphi 0, %s76
      %s91 = sphi 0, %s77
      %s95 = sphi 0, %s95
      %s97 = sphi 0, %s95
      %s98 = sphi 0, %s97
      %s112 = sphi 0, %s98
      %s116 = sphi 0, %s116
      %s118 = sphi 0, %s116
      %s119 = sphi 0, %s118
      %s133 = sphi 0, %s119
      %s139 = sphi 0, %s141
      %s142 = sphi 0, %s139
      %s143 = sphi 0, %s142
      %s159 = sphi 0, %s143
    $region4: #{tpu_custom_call.1} parent=1 // loop_header_branch
      %22 = sbr.rel (%p20) target = $region8
    $region5: #{tpu_custom_call.1} parent=1 // loop_body
      %s24 = ssub.s32 %s19, 1
      %s25 = ssub.s32 %s19, 2
      %s26 = sadd.s32 %s19, 1
      %s27 = ssub.s32 %s19, %s26
      %p28 = scmp.eq.s32.totalorder %s27, 0
      %s30 = sadd.s32 %s29, 1
      %s31 = scalar_select %p28, %s29, %s30
      %p34 = pneg %p28
      %p35 = scmp.eq.s32.totalorder %s19, 1
      %p36 = por %p34, %p35
      %p37 = scmp.ne.s32.totalorder %s29, %s32
      %p38 = scmp.eq.s32.totalorder %s19, 0
      %p39 = por %p37, %p38
      %p40 = scmp.ne.s32.totalorder %s29, %s32
      %p41 = scmp.eq.s32.totalorder %s24, 1
      %p42 = por %p40, %p41
      %p43 = scmp.ne.s32.totalorder %s32, %s33
      %p44 = scmp.eq.s32.totalorder %s24, 0
      %p45 = por %p43, %p44
      %p46 = scmp.ne.s32.totalorder %s32, %s33
      %p47 = scmp.eq.s32.totalorder %s25, 1
      %p48 = por %p46, %p47
      %p50 = scmp.ne.s32.totalorder %s33, %s49
      %p51 = scmp.eq.s32.totalorder %s25, 0
      %p52 = por %p50, %p51
      %s54 = sadd.s32 %s53, 1
      %p57 = scmp.eq.s32.totalorder %s19, 1
      %p58 = scmp.ne.s32.totalorder %s53, %s55
      %p59 = scmp.eq.s32.totalorder %s19, 0
      %p60 = por %p58, %p59
      %p61 = scmp.ne.s32.totalorder %s53, %s55
      %p62 = scmp.eq.s32.totalorder %s24, 1
      %p63 = por %p61, %p62
      %p64 = scmp.ne.s32.totalorder %s55, %s56
      %p65 = scmp.eq.s32.totalorder %s24, 0
      %p66 = por %p64, %p65
      %p67 = scmp.ne.s32.totalorder %s55, %s56
      %p68 = scmp.eq.s32.totalorder %s25, 1
      %p69 = por %p67, %p68
      %p71 = scmp.ne.s32.totalorder %s56, %s70
      %p72 = scmp.eq.s32.totalorder %s25, 0
      %p73 = por %p71, %p72
      %s75 = sadd.s32 %s74, 1
      %p78 = scmp.eq.s32.totalorder %s19, 1
      %p79 = scmp.ne.s32.totalorder %s74, %s76
      %p80 = scmp.eq.s32.totalorder %s19, 0
      %p81 = por %p79, %p80
      %p82 = scmp.ne.s32.totalorder %s74, %s76
      %p83 = scmp.eq.s32.totalorder %s24, 1
      %p84 = por %p82, %p83
      %p85 = scmp.ne.s32.totalorder %s76, %s77
      %p86 = scmp.eq.s32.totalorder %s24, 0
      %p87 = por %p85, %p86
      %p88 = scmp.ne.s32.totalorder %s76, %s77
      %p89 = scmp.eq.s32.totalorder %s25, 1
      %p90 = por %p88, %p89
      %p92 = scmp.ne.s32.totalorder %s77, %s91
      %p93 = scmp.eq.s32.totalorder %s25, 0
      %p94 = por %p92, %p93
      %s96 = sadd.s32 %s95, 1
      %p99 = scmp.eq.s32.totalorder %s19, 1
      %p100 = scmp.ne.s32.totalorder %s95, %s97
      %p101 = scmp.eq.s32.totalorder %s19, 0
      %p102 = por %p100, %p101
      %p103 = scmp.ne.s32.totalorder %s95, %s97
      %p104 = scmp.eq.s32.totalorder %s24, 1
      %p105 = por %p103, %p104
      %p106 = scmp.ne.s32.totalorder %s97, %s98
      %p107 = scmp.eq.s32.totalorder %s24, 0
      %p108 = por %p106, %p107
      %p109 = scmp.ne.s32.totalorder %s97, %s98
      %p110 = scmp.eq.s32.totalorder %s25, 1
      %p111 = por %p109, %p110
      %p113 = scmp.ne.s32.totalorder %s98, %s112
      %p114 = scmp.eq.s32.totalorder %s25, 0
      %p115 = por %p113, %p114
      %s117 = sadd.s32 %s116, 1
      %p120 = scmp.eq.s32.totalorder %s19, 1
      %p121 = scmp.ne.s32.totalorder %s116, %s118
      %p122 = scmp.eq.s32.totalorder %s19, 0
      %p123 = por %p121, %p122
      %p124 = scmp.ne.s32.totalorder %s116, %s118
      %p125 = scmp.eq.s32.totalorder %s24, 1
      %p126 = por %p124, %p125
      %p127 = scmp.ne.s32.totalorder %s118, %s119
      %p128 = scmp.eq.s32.totalorder %s24, 0
      %p129 = por %p127, %p128
      %p130 = scmp.ne.s32.totalorder %s118, %s119
      %p131 = scmp.eq.s32.totalorder %s25, 1
      %p132 = por %p130, %p131
      %p134 = scmp.ne.s32.totalorder %s119, %s133
      %p135 = scmp.eq.s32.totalorder %s25, 0
      %p136 = por %p134, %p135
      %s137 = ssub.s32 %s19, %s26
      %p138 = scmp.eq.s32.totalorder %s137, 0
      %s140 = sadd.s32 %s139, 1
      %s141 = scalar_select %p138, %s139, %s140
      %p144 = pneg %p138
      %p145 = scmp.eq.s32.totalorder %s19, 1
      %p146 = por %p144, %p145
      %p147 = scmp.ne.s32.totalorder %s139, %s142
      %p148 = scmp.eq.s32.totalorder %s19, 0
      %p149 = por %p147, %p148
      %p150 = scmp.ne.s32.totalorder %s139, %s142
      %p151 = scmp.eq.s32.totalorder %s24, 1
      %p152 = por %p150, %p151
      %p153 = scmp.ne.s32.totalorder %s142, %s143
      %p154 = scmp.eq.s32.totalorder %s24, 0
      %p155 = por %p153, %p154
      %p156 = scmp.ne.s32.totalorder %s142, %s143
      %p157 = scmp.eq.s32.totalorder %s25, 1
      %p158 = por %p156, %p157
      %p160 = scmp.ne.s32.totalorder %s143, %s159
      %p161 = scmp.eq.s32.totalorder %s25, 0
      %p162 = por %p160, %p161
      %p163 = scmp.le.s32.totalorder 1, %s19
      %p164 = scmp.lt.s32.totalorder %s19, 3
      %p165 = pnand %p163, %p164
      %p166 = pneg %p165
      // Predicated region
      $region9: #{tpu_custom_call.1} parent=5 // pred_check
        _
      $region10: #{tpu_custom_call.1} parent=5 // pred_check_branch
        %168 = sbr.rel (%p165) target = $region12
      $region11: #{tpu_custom_call.1} parent=5 // pred_region
        %s169 = ssub.s32 %s19, 1
        // Predicated region
        $region13: #{tpu_custom_call.1} parent=11 // pred_check
          %p170 = pneg %p66
        $region14: #{tpu_custom_call.1} parent=11 // pred_check_branch
          %172 = sbr.rel (%p170) target = $region16
        $region15: #{tpu_custom_call.1} parent=11 // pred_region
          _
        $region16: #{tpu_custom_call.1} parent=11 // pred_fallthru
          _
        // Predicated region
        $region17: #{tpu_custom_call.1} parent=11 // pred_check
          %p173 = pneg %p87
        $region18: #{tpu_custom_call.1} parent=11 // pred_check_branch
          %175 = sbr.rel (%p173) target = $region20
        $region19: #{tpu_custom_call.1} parent=11 // pred_region
          %s177 = ssub.s32 16, 16
          %178 = vsyncadd [#allocation6], %s177
          %s180 = sshll.u32 [#allocation5], 4
          %s181 = int_to_ptr.vmem [resolvable:$true] %s180
          %183 = dma.hbm_to_vmem [thread:$0]  %s2, 16, %s181, [#allocation6]
        $region20: #{tpu_custom_call.1} parent=11 // pred_fallthru
          _
        // Predicated region
        $region21: #{tpu_custom_call.1} parent=11 // pred_check
          %p184 = pneg %p108
        $region22: #{tpu_custom_call.1} parent=11 // pred_check_branch
          %186 = sbr.rel (%p184) target = $region24
        $region23: #{tpu_custom_call.1} parent=11 // pred_region
          %s188 = ssub.s32 32, 32
          %189 = vsyncadd [#allocation6], %s188
          %s191 = sshll.u32 [#allocation7], 4
          %s192 = int_to_ptr.vmem [resolvable:$true] %s191
          %194 = dma.hbm_to_vmem [thread:$0]  %s3, 32, %s192, [#allocation6]
        $region24: #{tpu_custom_call.1} parent=11 // pred_fallthru
          _
        // Predicated region
        $region25: #{tpu_custom_call.1} parent=11 // pred_check
          %p195 = pneg %p129
        $region26: #{tpu_custom_call.1} parent=11 // pred_check_branch
          %197 = sbr.rel (%p195) target = $region28
        $region27: #{tpu_custom_call.1} parent=11 // pred_region
          %s199 = ssub.s32 16, 16
          %200 = vsyncadd [#allocation9], %s199
          %s202 = sshll.u32 [#allocation8], 4
          %s203 = int_to_ptr.vmem [resolvable:$true] %s202
          %205 = dma.hbm_to_vmem [thread:$0]  %s4, 16, %s203, [#allocation9]
        $region28: #{tpu_custom_call.1} parent=11 // pred_fallthru
          _
      $region12: #{tpu_custom_call.1} parent=5 // pred_fallthru
        _
      %p206 = scmp.lt.s32.totalorder %s19, 2
      // Predicated region
      $region29: #{tpu_custom_call.1} parent=5 // pred_check
        %p207 = pneg %p206
      $region30: #{tpu_custom_call.1} parent=5 // pred_check_branch
        %209 = sbr.rel (%p207) target = $region32
      $region31: #{tpu_custom_call.1} parent=5 // pred_region
        // Predicated region
        $region33: #{tpu_custom_call.1} parent=31 // pred_check
          %p210 = pneg %p39
        $region34: #{tpu_custom_call.1} parent=31 // pred_check_branch
          %212 = sbr.rel (%p210) target = $region36
        $region35: #{tpu_custom_call.1} parent=31 // pred_region
          %s213 = sand.u32 %s29, 1
          %s214 = scalar_lea.sflag [#allocation3], %s213
          %s215 = sand.u32 %s29, 1
          %s216 = smul.addr %s215, 1152
          %s217 = scalar_lea.vmem [#allocation2], %s216
          %s218 = smul.u32 2, %s19
          %s220 = ssub.s32 18432, 18432
          %221 = vsyncadd %s214, %s220
          %s222 = smul.addr %s218, 72
          %s223 = smul.addr %s222, 128
          %s224 = scalar_lea.hbm %s0, %s223
          %s225 = sshll.u32 %s217, 4
          %s226 = int_to_ptr.vmem [resolvable:$true] %s225
          %231 = dma.hbm_to_vmem [thread:$0]  %s224, 18432, %s226, %s214, 2304, 2304, 144
        $region36: #{tpu_custom_call.1} parent=31 // pred_fallthru
          _
      $region32: #{tpu_custom_call.1} parent=5 // pred_fallthru
        _
      %p232 = scmp.le.s32.totalorder 1, %s19
      %p233 = scmp.lt.s32.totalorder %s19, 3
      %p234 = pnand %p232, %p233
      %p235 = pneg %p234
      // Predicated region
      $region37: #{tpu_custom_call.1} parent=5 // pred_check
        _
      $region38: #{tpu_custom_call.1} parent=5 // pred_check_branch
        %237 = sbr.rel (%p234) target = $region40
      $region39: #{tpu_custom_call.1} parent=5 // pred_region
        %s238 = ssub.s32 %s19, 1
        %s239 = sand.u32 %s32, 1
        %s240 = scalar_lea.sflag [#allocation3], %s239
        %s241 = sand.u32 %s32, 1
        %s242 = smul.addr %s241, 1152
        %s243 = scalar_lea.vmem [#allocation2], %s242
        // Predicated region
        $region41: #{tpu_custom_call.1} parent=39 // pred_check
          %p244 = pneg %p45
        $region42: #{tpu_custom_call.1} parent=39 // pred_check_branch
          %246 = sbr.rel (%p244) target = $region44
        $region43: #{tpu_custom_call.1} parent=39 // pred_region
          %247 = dma.done %s240, 18432
        $region44: #{tpu_custom_call.1} parent=39 // pred_fallthru
          _
        // Predicated region
        $region45: #{tpu_custom_call.1} parent=39 // pred_check
          %p248 = pneg %p87
        $region46: #{tpu_custom_call.1} parent=39 // pred_check_branch
          %250 = sbr.rel (%p248) target = $region48
        $region47: #{tpu_custom_call.1} parent=39 // pred_region
          %251 = dma.done [#allocation6], 16
        $region48: #{tpu_custom_call.1} parent=39 // pred_fallthru
          _
        // Predicated region
        $region49: #{tpu_custom_call.1} parent=39 // pred_check
          %p252 = pneg %p108
        $region50: #{tpu_custom_call.1} parent=39 // pred_check_branch
          %254 = sbr.rel (%p252) target = $region52
        $region51: #{tpu_custom_call.1} parent=39 // pred_region
          %255 = dma.done [#allocation6], 32
        $region52: #{tpu_custom_call.1} parent=39 // pred_fallthru
          _
        // Predicated region
        $region53: #{tpu_custom_call.1} parent=39 // pred_check
          %p256 = pneg %p129
        $region54: #{tpu_custom_call.1} parent=39 // pred_check_branch
          %258 = sbr.rel (%p256) target = $region56
        $region55: #{tpu_custom_call.1} parent=39 // pred_region
          %259 = dma.done [#allocation9], 16
        $region56: #{tpu_custom_call.1} parent=39 // pred_fallthru
          _
        %s260 = sand.u32 %s32, 1
        %s261 = scalar_lea.sflag [#allocation3], %s260
        %s262 = sand.u32 %s32, 1
        %s263 = smul.addr %s262, 1152
        %s264 = scalar_lea.vmem [#allocation2], %s263
        %p265 = pneg %p45
        %p266 = pneg %p42
        %p267 = pneg %p66
        %p268 = pneg %p63
        %p269 = pneg %p87
        %p270 = pneg %p84
        %p271 = pneg %p108
        %p272 = pneg %p105
        %p273 = pneg %p129
        %p274 = pneg %p126
        %p275 = pneg %p155
        %p276 = pneg %p152
        %s277 = sand.u32 %s142, 1
        %s278 = scalar_lea.sflag [#allocation4], %s277
        %s279 = sand.u32 %s142, 1
        %s280 = smul.addr %s279, 1152
        %s281 = scalar_lea.vmem [#allocation10], %s280
        %s282 = smul.u32 2, %s24
        %s283 = smul.u32 2, %s24
        %v284 = vld [vmem:[%s243] sm:$0xff]
        %v285 = vld [vmem:[%s243 + $0x8] sm:$0xff]
        %v286 = vld [vmem:[%s243 + $0x10] sm:$0xff]
        %v287 = vld [vmem:[%s243 + $0x18] sm:$0xff]
        %v288 = vld [vmem:[%s243 + $0x20] sm:$0xff]
        %v289 = vld [vmem:[%s243 + $0x28] sm:$0xff]
        %v290 = vld [vmem:[%s243 + $0x90] sm:$0xff]
        %v291 = vld [vmem:[%s243 + $0x98] sm:$0xff]
        %v292 = vld [vmem:[%s243 + $0xa0] sm:$0xff]
        %v293 = vld [vmem:[%s243 + $0xa8] sm:$0xff]
        %v294 = vld [vmem:[%s243 + $0xb0] sm:$0xff]
        %v295 = vld [vmem:[%s243 + $0xb8] sm:$0xff]
        %v296 = vld [vmem:[%s243 + $0x120] sm:$0xff]
        %v297 = vld [vmem:[%s243 + $0x128] sm:$0xff]
        %v298 = vld [vmem:[%s243 + $0x130] sm:$0xff]
        %v299 = vld [vmem:[%s243 + $0x138] sm:$0xff]
        %v300 = vld [vmem:[%s243 + $0x140] sm:$0xff]
        %v301 = vld [vmem:[%s243 + $0x148] sm:$0xff]
        %v302 = vld [vmem:[%s243 + $0x1b0] sm:$0xff]
        %v303 = vld [vmem:[%s243 + $0x1b8] sm:$0xff]
        %v304 = vld [vmem:[%s243 + $0x1c0] sm:$0xff]
        %v305 = vld [vmem:[%s243 + $0x1c8] sm:$0xff]
        %v306 = vld [vmem:[%s243 + $0x1d0] sm:$0xff]
        %v307 = vld [vmem:[%s243 + $0x1d8] sm:$0xff]
        %v308 = vld [vmem:[%s243 + $0x240] sm:$0xff]
        %v309 = vld [vmem:[%s243 + $0x248] sm:$0xff]
        %v310 = vld [vmem:[%s243 + $0x250] sm:$0xff]
        %v311 = vld [vmem:[%s243 + $0x258] sm:$0xff]
        %v312 = vld [vmem:[%s243 + $0x260] sm:$0xff]
        %v313 = vld [vmem:[%s243 + $0x268] sm:$0xff]
        %v314 = vld [vmem:[%s243 + $0x2d0] sm:$0xff]
        %v315 = vld [vmem:[%s243 + $0x2d8] sm:$0xff]
        %v316 = vld [vmem:[%s243 + $0x2e0] sm:$0xff]
        %v317 = vld [vmem:[%s243 + $0x2e8] sm:$0xff]
        %v318 = vld [vmem:[%s243 + $0x2f0] sm:$0xff]
        %v319 = vld [vmem:[%s243 + $0x2f8] sm:$0xff]
        %v320 = vld [vmem:[%s243 + $0x360] sm:$0xff]
        %v321 = vld [vmem:[%s243 + $0x368] sm:$0xff]
        %v322 = vld [vmem:[%s243 + $0x370] sm:$0xff]
        %v323 = vld [vmem:[%s243 + $0x378] sm:$0xff]
        %v324 = vld [vmem:[%s243 + $0x380] sm:$0xff]
        %v325 = vld [vmem:[%s243 + $0x388] sm:$0xff]
        %v326 = vld [vmem:[%s243 + $0x3f0] sm:$0xff]
        %v327 = vld [vmem:[%s243 + $0x3f8] sm:$0xff]
        %v328 = vld [vmem:[%s243 + $0x400] sm:$0xff]
        %v329 = vld [vmem:[%s243 + $0x408] sm:$0xff]
        %v330 = vld [vmem:[%s243 + $0x410] sm:$0xff]
        %v331 = vld [vmem:[%s243 + $0x418] sm:$0xff]
        %v332 = vadd.f32 %v284, %v285
        %v333 = vadd.f32 %v332, %v286
        %v334 = vadd.f32 %v333, %v287
        %v335 = vadd.f32 %v334, %v288
        %v336 = vadd.f32 %v335, %v289
        %337 = vadd.xlane.f32.xlu0 %v336
        %v338 = vpop.xlane.xlu0 %337
        %v339 = vadd.f32 %v290, %v291
        %v340 = vadd.f32 %v339, %v292
        %v341 = vadd.f32 %v340, %v293
        %v342 = vadd.f32 %v341, %v294
        %v343 = vadd.f32 %v342, %v295
        %344 = vadd.xlane.f32.xlu0 %v343
        %v345 = vpop.xlane.xlu0 %344
        %v346 = vadd.f32 %v296, %v297
        %v347 = vadd.f32 %v346, %v298
        %v348 = vadd.f32 %v347, %v299
        %v349 = vadd.f32 %v348, %v300
        %v350 = vadd.f32 %v349, %v301
        %351 = vadd.xlane.f32.xlu0 %v350
        %v352 = vpop.xlane.xlu0 %351
        %v353 = vadd.f32 %v302, %v303
        %v354 = vadd.f32 %v353, %v304
        %v355 = vadd.f32 %v354, %v305
        %v356 = vadd.f32 %v355, %v306
        %v357 = vadd.f32 %v356, %v307
        %358 = vadd.xlane.f32.xlu0 %v357
        %v359 = vpop.xlane.xlu0 %358
        %v360 = vadd.f32 %v308, %v309
        %v361 = vadd.f32 %v360, %v310
        %v362 = vadd.f32 %v361, %v311
        %v363 = vadd.f32 %v362, %v312
        %v364 = vadd.f32 %v363, %v313
        %365 = vadd.xlane.f32.xlu0 %v364
        %v366 = vpop.xlane.xlu0 %365
        %v367 = vadd.f32 %v314, %v315
        %v368 = vadd.f32 %v367, %v316
        %v369 = vadd.f32 %v368, %v317
        %v370 = vadd.f32 %v369, %v318
        %v371 = vadd.f32 %v370, %v319
        %372 = vadd.xlane.f32.xlu0 %v371
        %v373 = vpop.xlane.xlu0 %372
        %v374 = vadd.f32 %v320, %v321
        %v375 = vadd.f32 %v374, %v322
        %v376 = vadd.f32 %v375, %v323
        %v377 = vadd.f32 %v376, %v324
        %v378 = vadd.f32 %v377, %v325
        %379 = vadd.xlane.f32.xlu0 %v378
        %v380 = vpop.xlane.xlu0 %379
        %v381 = vadd.f32 %v326, %v327
        %v382 = vadd.f32 %v381, %v328
        %v383 = vadd.f32 %v382, %v329
        %v384 = vadd.f32 %v383, %v330
        %v385 = vadd.f32 %v384, %v331
        %386 = vadd.xlane.f32.xlu0 %v385
        %v387 = vpop.xlane.xlu0 %386
        %v388 = vadd.f32 %v338, 0.0
        %v389 = vadd.f32 %v345, 0.0
        %v390 = vadd.f32 %v352, 0.0
        %v391 = vadd.f32 %v359, 0.0
        %v392 = vadd.f32 %v366, 0.0
        %v393 = vadd.f32 %v373, 0.0
        %v394 = vadd.f32 %v380, 0.0
        %v395 = vadd.f32 %v387, 0.0
        %v396 = vmax.f32 %v284, %v285
        %v397 = vmax.f32 %v396, %v286
        %v398 = vmax.f32 %v397, %v287
        %v399 = vmax.f32 %v398, %v288
        %v400 = vmax.f32 %v399, %v289
        %401 = vmax.xlane.f32.xlu0 %v400
        %v402 = vpop.xlane.xlu0 %401
        %v403 = vmax.f32 %v290, %v291
        %v404 = vmax.f32 %v403, %v292
        %v405 = vmax.f32 %v404, %v293
        %v406 = vmax.f32 %v405, %v294
        %v407 = vmax.f32 %v406, %v295
        %408 = vmax.xlane.f32.xlu0 %v407
        %v409 = vpop.xlane.xlu0 %408
        %v410 = vmax.f32 %v296, %v297
        %v411 = vmax.f32 %v410, %v298
        %v412 = vmax.f32 %v411, %v299
        %v413 = vmax.f32 %v412, %v300
        %v414 = vmax.f32 %v413, %v301
        %415 = vmax.xlane.f32.xlu0 %v414
        %v416 = vpop.xlane.xlu0 %415
        %v417 = vmax.f32 %v302, %v303
        %v418 = vmax.f32 %v417, %v304
        %v419 = vmax.f32 %v418, %v305
        %v420 = vmax.f32 %v419, %v306
        %v421 = vmax.f32 %v420, %v307
        %422 = vmax.xlane.f32.xlu0 %v421
        %v423 = vpop.xlane.xlu0 %422
        %v424 = vmax.f32 %v308, %v309
        %v425 = vmax.f32 %v424, %v310
        %v426 = vmax.f32 %v425, %v311
        %v427 = vmax.f32 %v426, %v312
        %v428 = vmax.f32 %v427, %v313
        %429 = vmax.xlane.f32.xlu0 %v428
        %v430 = vpop.xlane.xlu0 %429
        %v431 = vmax.f32 %v314, %v315
        %v432 = vmax.f32 %v431, %v316
        %v433 = vmax.f32 %v432, %v317
        %v434 = vmax.f32 %v433, %v318
        %v435 = vmax.f32 %v434, %v319
        %436 = vmax.xlane.f32.xlu0 %v435
        %v437 = vpop.xlane.xlu0 %436
        %v438 = vmax.f32 %v320, %v321
        %v439 = vmax.f32 %v438, %v322
        %v440 = vmax.f32 %v439, %v323
        %v441 = vmax.f32 %v440, %v324
        %v442 = vmax.f32 %v441, %v325
        %443 = vmax.xlane.f32.xlu0 %v442
        %v444 = vpop.xlane.xlu0 %443
        %v445 = vmax.f32 %v326, %v327
        %v446 = vmax.f32 %v445, %v328
        %v447 = vmax.f32 %v446, %v329
        %v448 = vmax.f32 %v447, %v330
        %v449 = vmax.f32 %v448, %v331
        %450 = vmax.xlane.f32.xlu0 %v449
        %v451 = vpop.xlane.xlu0 %450
        %s452 = scalar_lea.vmem %s243, 48 [#allocation2]
        %v453 = vld [vmem:[%s452] sm:$0xff]
        %v454 = vld [vmem:[%s452 + $0x8] sm:$0xff]
        %v455 = vld [vmem:[%s452 + $0x10] sm:$0xff]
        %v456 = vld [vmem:[%s452 + $0x18] sm:$0xff]
        %v457 = vld [vmem:[%s452 + $0x20] sm:$0xff]
        %v458 = vld [vmem:[%s452 + $0x28] sm:$0xff]
        %v459 = vld [vmem:[%s452 + $0x90] sm:$0xff]
        %v460 = vld [vmem:[%s452 + $0x98] sm:$0xff]
        %v461 = vld [vmem:[%s452 + $0xa0] sm:$0xff]
        %v462 = vld [vmem:[%s452 + $0xa8] sm:$0xff]
        %v463 = vld [vmem:[%s452 + $0xb0] sm:$0xff]
        %v464 = vld [vmem:[%s452 + $0xb8] sm:$0xff]
        %v465 = vld [vmem:[%s452 + $0x120] sm:$0xff]
        %v466 = vld [vmem:[%s452 + $0x128] sm:$0xff]
        %v467 = vld [vmem:[%s452 + $0x130] sm:$0xff]
        %v468 = vld [vmem:[%s452 + $0x138] sm:$0xff]
        %v469 = vld [vmem:[%s452 + $0x140] sm:$0xff]
        %v470 = vld [vmem:[%s452 + $0x148] sm:$0xff]
        %v471 = vld [vmem:[%s452 + $0x1b0] sm:$0xff]
        %v472 = vld [vmem:[%s452 + $0x1b8] sm:$0xff]
        %v473 = vld [vmem:[%s452 + $0x1c0] sm:$0xff]
        %v474 = vld [vmem:[%s452 + $0x1c8] sm:$0xff]
        %v475 = vld [vmem:[%s452 + $0x1d0] sm:$0xff]
        %v476 = vld [vmem:[%s452 + $0x1d8] sm:$0xff]
        %v477 = vld [vmem:[%s452 + $0x240] sm:$0xff]
        %v478 = vld [vmem:[%s452 + $0x248] sm:$0xff]
        %v479 = vld [vmem:[%s452 + $0x250] sm:$0xff]
        %v480 = vld [vmem:[%s452 + $0x258] sm:$0xff]
        %v481 = vld [vmem:[%s452 + $0x260] sm:$0xff]
        %v482 = vld [vmem:[%s452 + $0x268] sm:$0xff]
        %v483 = vld [vmem:[%s452 + $0x2d0] sm:$0xff]
        %v484 = vld [vmem:[%s452 + $0x2d8] sm:$0xff]
        %v485 = vld [vmem:[%s452 + $0x2e0] sm:$0xff]
        %v486 = vld [vmem:[%s452 + $0x2e8] sm:$0xff]
        %v487 = vld [vmem:[%s452 + $0x2f0] sm:$0xff]
        %v488 = vld [vmem:[%s452 + $0x2f8] sm:$0xff]
        %v489 = vld [vmem:[%s452 + $0x360] sm:$0xff]
        %v490 = vld [vmem:[%s452 + $0x368] sm:$0xff]
        %v491 = vld [vmem:[%s452 + $0x370] sm:$0xff]
        %v492 = vld [vmem:[%s452 + $0x378] sm:$0xff]
        %v493 = vld [vmem:[%s452 + $0x380] sm:$0xff]
        %v494 = vld [vmem:[%s452 + $0x388] sm:$0xff]
        %v495 = vld [vmem:[%s452 + $0x3f0] sm:$0xff]
        %v496 = vld [vmem:[%s452 + $0x3f8] sm:$0xff]
        %v497 = vld [vmem:[%s452 + $0x400] sm:$0xff]
        %v498 = vld [vmem:[%s452 + $0x408] sm:$0xff]
        %v499 = vld [vmem:[%s452 + $0x410] sm:$0xff]
        %v500 = vld [vmem:[%s452 + $0x418] sm:$0xff]
        %v501 = vadd.f32 %v453, %v454
        %v502 = vadd.f32 %v501, %v455
        %v503 = vadd.f32 %v502, %v456
        %v504 = vadd.f32 %v503, %v457
        %v505 = vadd.f32 %v504, %v458
        %506 = vadd.xlane.f32.xlu0 %v505
        %v507 = vpop.xlane.xlu0 %506
        %v508 = vadd.f32 %v459, %v460
        %v509 = vadd.f32 %v508, %v461
        %v510 = vadd.f32 %v509, %v462
        %v511 = vadd.f32 %v510, %v463
        %v512 = vadd.f32 %v511, %v464
        %513 = vadd.xlane.f32.xlu0 %v512
        %v514 = vpop.xlane.xlu0 %513
        %v515 = vadd.f32 %v465, %v466
        %v516 = vadd.f32 %v515, %v467
        %v517 = vadd.f32 %v516, %v468
        %v518 = vadd.f32 %v517, %v469
        %v519 = vadd.f32 %v518, %v470
        %520 = vadd.xlane.f32.xlu0 %v519
        %v521 = vpop.xlane.xlu0 %520
        %v522 = vadd.f32 %v471, %v472
        %v523 = vadd.f32 %v522, %v473
        %v524 = vadd.f32 %v523, %v474
        %v525 = vadd.f32 %v524, %v475
        %v526 = vadd.f32 %v525, %v476
        %527 = vadd.xlane.f32.xlu0 %v526
        %v528 = vpop.xlane.xlu0 %527
        %v529 = vadd.f32 %v477, %v478
        %v530 = vadd.f32 %v529, %v479
        %v531 = vadd.f32 %v530, %v480
        %v532 = vadd.f32 %v531, %v481
        %v533 = vadd.f32 %v532, %v482
        %534 = vadd.xlane.f32.xlu0 %v533
        %v535 = vpop.xlane.xlu0 %534
        %v536 = vadd.f32 %v483, %v484
        %v537 = vadd.f32 %v536, %v485
        %v538 = vadd.f32 %v537, %v486
        %v539 = vadd.f32 %v538, %v487
        %v540 = vadd.f32 %v539, %v488
        %541 = vadd.xlane.f32.xlu0 %v540
        %v542 = vpop.xlane.xlu0 %541
        %v543 = vadd.f32 %v489, %v490
        %v544 = vadd.f32 %v543, %v491
        %v545 = vadd.f32 %v544, %v492
        %v546 = vadd.f32 %v545, %v493
        %v547 = vadd.f32 %v546, %v494
        %548 = vadd.xlane.f32.xlu0 %v547
        %v549 = vpop.xlane.xlu0 %548
        %v550 = vadd.f32 %v495, %v496
        %v551 = vadd.f32 %v550, %v497
        %v552 = vadd.f32 %v551, %v498
        %v553 = vadd.f32 %v552, %v499
        %v554 = vadd.f32 %v553, %v500
        %555 = vadd.xlane.f32.xlu0 %v554
        %v556 = vpop.xlane.xlu0 %555
        %v557 = vadd.f32 %v388, %v507
        %v558 = vadd.f32 %v389, %v514
        %v559 = vadd.f32 %v390, %v521
        %v560 = vadd.f32 %v391, %v528
        %v561 = vadd.f32 %v392, %v535
        %v562 = vadd.f32 %v393, %v542
        %v563 = vadd.f32 %v394, %v549
        %v564 = vadd.f32 %v395, %v556
        %v565 = vmax.f32 %v453, %v454
        %v566 = vmax.f32 %v565, %v455
        %v567 = vmax.f32 %v566, %v456
        %v568 = vmax.f32 %v567, %v457
        %v569 = vmax.f32 %v568, %v458
        %570 = vmax.xlane.f32.xlu0 %v569
        %v571 = vpop.xlane.xlu0 %570
        %v572 = vmax.f32 %v459, %v460
        %v573 = vmax.f32 %v572, %v461
        %v574 = vmax.f32 %v573, %v462
        %v575 = vmax.f32 %v574, %v463
        %v576 = vmax.f32 %v575, %v464
        %577 = vmax.xlane.f32.xlu0 %v576
        %v578 = vpop.xlane.xlu0 %577
        %v579 = vmax.f32 %v465, %v466
        %v580 = vmax.f32 %v579, %v467
        %v581 = vmax.f32 %v580, %v468
        %v582 = vmax.f32 %v581, %v469
        %v583 = vmax.f32 %v582, %v470
        %584 = vmax.xlane.f32.xlu0 %v583
        %v585 = vpop.xlane.xlu0 %584
        %v586 = vmax.f32 %v471, %v472
        %v587 = vmax.f32 %v586, %v473
        %v588 = vmax.f32 %v587, %v474
        %v589 = vmax.f32 %v588, %v475
        %v590 = vmax.f32 %v589, %v476
        %591 = vmax.xlane.f32.xlu0 %v590
        %v592 = vpop.xlane.xlu0 %591
        %v593 = vmax.f32 %v477, %v478
        %v594 = vmax.f32 %v593, %v479
        %v595 = vmax.f32 %v594, %v480
        %v596 = vmax.f32 %v595, %v481
        %v597 = vmax.f32 %v596, %v482
        %598 = vmax.xlane.f32.xlu0 %v597
        %v599 = vpop.xlane.xlu0 %598
        %v600 = vmax.f32 %v483, %v484
        %v601 = vmax.f32 %v600, %v485
        %v602 = vmax.f32 %v601, %v486
        %v603 = vmax.f32 %v602, %v487
        %v604 = vmax.f32 %v603, %v488
        %605 = vmax.xlane.f32.xlu0 %v604
        %v606 = vpop.xlane.xlu0 %605
        %v607 = vmax.f32 %v489, %v490
        %v608 = vmax.f32 %v607, %v491
        %v609 = vmax.f32 %v608, %v492
        %v610 = vmax.f32 %v609, %v493
        %v611 = vmax.f32 %v610, %v494
        %612 = vmax.xlane.f32.xlu0 %v611
        %v613 = vpop.xlane.xlu0 %612
        %v614 = vmax.f32 %v495, %v496
        %v615 = vmax.f32 %v614, %v497
        %v616 = vmax.f32 %v615, %v498
        %v617 = vmax.f32 %v616, %v499
        %v618 = vmax.f32 %v617, %v500
        %619 = vmax.xlane.f32.xlu0 %v618
        %v620 = vpop.xlane.xlu0 %619
        %v621 = vmax.f32 %v402, %v571
        %v622 = vmax.f32 %v409, %v578
        %v623 = vmax.f32 %v416, %v585
        %v624 = vmax.f32 %v423, %v592
        %v625 = vmax.f32 %v430, %v599
        %v626 = vmax.f32 %v437, %v606
        %v627 = vmax.f32 %v444, %v613
        %v628 = vmax.f32 %v451, %v620
        %s629 = scalar_lea.vmem %s243, 96 [#allocation2]
        %v630 = vld [vmem:[%s629] sm:$0xff]
        %v631 = vld [vmem:[%s629 + $0x8] sm:$0xff]
        %v632 = vld [vmem:[%s629 + $0x10] sm:$0xff]
        %v633 = vld [vmem:[%s629 + $0x18] sm:$0xff]
        %v634 = vld [vmem:[%s629 + $0x20] sm:$0xff]
        %v635 = vld [vmem:[%s629 + $0x28] sm:$0xff]
        %v636 = vld [vmem:[%s629 + $0x90] sm:$0xff]
        %v637 = vld [vmem:[%s629 + $0x98] sm:$0xff]
        %v638 = vld [vmem:[%s629 + $0xa0] sm:$0xff]
        %v639 = vld [vmem:[%s629 + $0xa8] sm:$0xff]
        %v640 = vld [vmem:[%s629 + $0xb0] sm:$0xff]
        %v641 = vld [vmem:[%s629 + $0xb8] sm:$0xff]
        %v642 = vld [vmem:[%s629 + $0x120] sm:$0xff]
        %v643 = vld [vmem:[%s629 + $0x128] sm:$0xff]
        %v644 = vld [vmem:[%s629 + $0x130] sm:$0xff]
        %v645 = vld [vmem:[%s629 + $0x138] sm:$0xff]
        %v646 = vld [vmem:[%s629 + $0x140] sm:$0xff]
        %v647 = vld [vmem:[%s629 + $0x148] sm:$0xff]
        %v648 = vld [vmem:[%s629 + $0x1b0] sm:$0xff]
        %v649 = vld [vmem:[%s629 + $0x1b8] sm:$0xff]
        %v650 = vld [vmem:[%s629 + $0x1c0] sm:$0xff]
        %v651 = vld [vmem:[%s629 + $0x1c8] sm:$0xff]
        %v652 = vld [vmem:[%s629 + $0x1d0] sm:$0xff]
        %v653 = vld [vmem:[%s629 + $0x1d8] sm:$0xff]
        %v654 = vld [vmem:[%s629 + $0x240] sm:$0xff]
        %v655 = vld [vmem:[%s629 + $0x248] sm:$0xff]
        %v656 = vld [vmem:[%s629 + $0x250] sm:$0xff]
        %v657 = vld [vmem:[%s629 + $0x258] sm:$0xff]
        %v658 = vld [vmem:[%s629 + $0x260] sm:$0xff]
        %v659 = vld [vmem:[%s629 + $0x268] sm:$0xff]
        %v660 = vld [vmem:[%s629 + $0x2d0] sm:$0xff]
        %v661 = vld [vmem:[%s629 + $0x2d8] sm:$0xff]
        %v662 = vld [vmem:[%s629 + $0x2e0] sm:$0xff]
        %v663 = vld [vmem:[%s629 + $0x2e8] sm:$0xff]
        %v664 = vld [vmem:[%s629 + $0x2f0] sm:$0xff]
        %v665 = vld [vmem:[%s629 + $0x2f8] sm:$0xff]
        %v666 = vld [vmem:[%s629 + $0x360] sm:$0xff]
        %v667 = vld [vmem:[%s629 + $0x368] sm:$0xff]
        %v668 = vld [vmem:[%s629 + $0x370] sm:$0xff]
        %v669 = vld [vmem:[%s629 + $0x378] sm:$0xff]
        %v670 = vld [vmem:[%s629 + $0x380] sm:$0xff]
        %v671 = vld [vmem:[%s629 + $0x388] sm:$0xff]
        %v672 = vld [vmem:[%s629 + $0x3f0] sm:$0xff]
        %v673 = vld [vmem:[%s629 + $0x3f8] sm:$0xff]
        %v674 = vld [vmem:[%s629 + $0x400] sm:$0xff]
        %v675 = vld [vmem:[%s629 + $0x408] sm:$0xff]
        %v676 = vld [vmem:[%s629 + $0x410] sm:$0xff]
        %v677 = vld [vmem:[%s629 + $0x418] sm:$0xff]
        %v678 = vadd.f32 %v630, %v631
        %v679 = vadd.f32 %v678, %v632
        %v680 = vadd.f32 %v679, %v633
        %v681 = vadd.f32 %v680, %v634
        %v682 = vadd.f32 %v681, %v635
        %683 = vadd.xlane.f32.xlu0 %v682
        %v684 = vpop.xlane.xlu0 %683
        %v685 = vadd.f32 %v636, %v637
        %v686 = vadd.f32 %v685, %v638
        %v687 = vadd.f32 %v686, %v639
        %v688 = vadd.f32 %v687, %v640
        %v689 = vadd.f32 %v688, %v641
        %690 = vadd.xlane.f32.xlu0 %v689
        %v691 = vpop.xlane.xlu0 %690
        %v692 = vadd.f32 %v642, %v643
        %v693 = vadd.f32 %v692, %v644
        %v694 = vadd.f32 %v693, %v645
        %v695 = vadd.f32 %v694, %v646
        %v696 = vadd.f32 %v695, %v647
        %697 = vadd.xlane.f32.xlu0 %v696
        %v698 = vpop.xlane.xlu0 %697
        %v699 = vadd.f32 %v648, %v649
        %v700 = vadd.f32 %v699, %v650
        %v701 = vadd.f32 %v700, %v651
        %v702 = vadd.f32 %v701, %v652
        %v703 = vadd.f32 %v702, %v653
        %704 = vadd.xlane.f32.xlu0 %v703
        %v705 = vpop.xlane.xlu0 %704
        %v706 = vadd.f32 %v654, %v655
        %v707 = vadd.f32 %v706, %v656
        %v708 = vadd.f32 %v707, %v657
        %v709 = vadd.f32 %v708, %v658
        %v710 = vadd.f32 %v709, %v659
        %711 = vadd.xlane.f32.xlu0 %v710
        %v712 = vpop.xlane.xlu0 %711
        %v713 = vadd.f32 %v660, %v661
        %v714 = vadd.f32 %v713, %v662
        %v715 = vadd.f32 %v714, %v663
        %v716 = vadd.f32 %v715, %v664
        %v717 = vadd.f32 %v716, %v665
        %718 = vadd.xlane.f32.xlu0 %v717
        %v719 = vpop.xlane.xlu0 %718
        %v720 = vadd.f32 %v666, %v667
        %v721 = vadd.f32 %v720, %v668
        %v722 = vadd.f32 %v721, %v669
        %v723 = vadd.f32 %v722, %v670
        %v724 = vadd.f32 %v723, %v671
        %725 = vadd.xlane.f32.xlu0 %v724
        %v726 = vpop.xlane.xlu0 %725
        %v727 = vadd.f32 %v672, %v673
        %v728 = vadd.f32 %v727, %v674
        %v729 = vadd.f32 %v728, %v675
        %v730 = vadd.f32 %v729, %v676
        %v731 = vadd.f32 %v730, %v677
        %732 = vadd.xlane.f32.xlu0 %v731
        %v733 = vpop.xlane.xlu0 %732
        %v734 = vadd.f32 %v557, %v684
        %v735 = vadd.f32 %v558, %v691
        %v736 = vadd.f32 %v559, %v698
        %v737 = vadd.f32 %v560, %v705
        %v738 = vadd.f32 %v561, %v712
        %v739 = vadd.f32 %v562, %v719
        %v740 = vadd.f32 %v563, %v726
        %v741 = vadd.f32 %v564, %v733
        %v742 = vmax.f32 %v630, %v631
        %v743 = vmax.f32 %v742, %v632
        %v744 = vmax.f32 %v743, %v633
        %v745 = vmax.f32 %v744, %v634
        %v746 = vmax.f32 %v745, %v635
        %747 = vmax.xlane.f32.xlu0 %v746
        %v748 = vpop.xlane.xlu0 %747
        %v749 = vmax.f32 %v636, %v637
        %v750 = vmax.f32 %v749, %v638
        %v751 = vmax.f32 %v750, %v639
        %v752 = vmax.f32 %v751, %v640
        %v753 = vmax.f32 %v752, %v641
        %754 = vmax.xlane.f32.xlu0 %v753
        %v755 = vpop.xlane.xlu0 %754
        %v756 = vmax.f32 %v642, %v643
        %v757 = vmax.f32 %v756, %v644
        %v758 = vmax.f32 %v757, %v645
        %v759 = vmax.f32 %v758, %v646
        %v760 = vmax.f32 %v759, %v647
        %761 = vmax.xlane.f32.xlu0 %v760
        %v762 = vpop.xlane.xlu0 %761
        %v763 = vmax.f32 %v648, %v649
        %v764 = vmax.f32 %v763, %v650
        %v765 = vmax.f32 %v764, %v651
        %v766 = vmax.f32 %v765, %v652
        %v767 = vmax.f32 %v766, %v653
        %768 = vmax.xlane.f32.xlu0 %v767
        %v769 = vpop.xlane.xlu0 %768
        %v770 = vmax.f32 %v654, %v655
        %v771 = vmax.f32 %v770, %v656
        %v772 = vmax.f32 %v771, %v657
        %v773 = vmax.f32 %v772, %v658
        %v774 = vmax.f32 %v773, %v659
        %775 = vmax.xlane.f32.xlu0 %v774
        %v776 = vpop.xlane.xlu0 %775
        %v777 = vmax.f32 %v660, %v661
        %v778 = vmax.f32 %v777, %v662
        %v779 = vmax.f32 %v778, %v663
        %v780 = vmax.f32 %v779, %v664
        %v781 = vmax.f32 %v780, %v665
        %782 = vmax.xlane.f32.xlu0 %v781
        %v783 = vpop.xlane.xlu0 %782
        %v784 = vmax.f32 %v666, %v667
        %v785 = vmax.f32 %v784, %v668
        %v786 = vmax.f32 %v785, %v669
        %v787 = vmax.f32 %v786, %v670
        %v788 = vmax.f32 %v787, %v671
        %789 = vmax.xlane.f32.xlu0 %v788
        %v790 = vpop.xlane.xlu0 %789
        %v791 = vmax.f32 %v672, %v673
        %v792 = vmax.f32 %v791, %v674
        %v793 = vmax.f32 %v792, %v675
        %v794 = vmax.f32 %v793, %v676
        %v795 = vmax.f32 %v794, %v677
        %796 = vmax.xlane.f32.xlu0 %v795
        %v797 = vpop.xlane.xlu0 %796
        %v798 = vmax.f32 %v621, %v748
        %v799 = vmax.f32 %v622, %v755
        %v800 = vmax.f32 %v623, %v762
        %v801 = vmax.f32 %v624, %v769
        %v802 = vmax.f32 %v625, %v776
        %v803 = vmax.f32 %v626, %v783
        %v804 = vmax.f32 %v627, %v790
        %v805 = vmax.f32 %v628, %v797
        %v806 = vmul.f32 %v734, 0.00043402778
        %v807 = vmul.f32 %v735, 0.00043402778
        %v808 = vmul.f32 %v736, 0.00043402778
        %v809 = vmul.f32 %v737, 0.00043402778
        %v810 = vmul.f32 %v738, 0.00043402778
        %v811 = vmul.f32 %v739, 0.00043402778
        %v812 = vmul.f32 %v740, 0.00043402778
        %v813 = vmul.f32 %v741, 0.00043402778
        %v822 = vlaneseq
        %v823 = vand.u32 %v822, 127
        %v824 = vlaneseq
        %v825 = vshrl.u32 %v824, 7
        %v826 = vsub.s32 %v823, %v825
        %v827 = vrot.slane %v806, %v826
        %v828 = vadd.s32 %v823, 4294967288
        %v829 = vlaneseq
        %v830 = vshrl.u32 %v829, 7
        %v831 = vsub.s32 %v828, %v830
        %v832 = vrot.slane %v807, %v831
        %vm833 = vcmask 130112
        %v834 = vsel %vm833, %v832, %v827
        %v835 = vadd.s32 %v823, 4294967280
        %v836 = vlaneseq
        %v837 = vshrl.u32 %v836, 7
        %v838 = vsub.s32 %v835, %v837
        %v839 = vrot.slane %v808, %v838
        %vm840 = vcmask 195712
        %v841 = vsel %vm840, %v839, %v834
        %v842 = vadd.s32 %v823, 4294967272
        %v843 = vlaneseq
        %v844 = vshrl.u32 %v843, 7
        %v845 = vsub.s32 %v842, %v844
        %v846 = vrot.slane %v809, %v845
        %vm847 = vcmask 261312
        %v848 = vsel %vm847, %v846, %v841
        %v849 = vlaneseq
        %v850 = vshrl.u32 %v849, 7
        %v851 = vsub.s32 %v823, %v850
        %v852 = vrot.slane %v810, %v851
        %v853 = vlaneseq
        %v854 = vshrl.u32 %v853, 7
        %v855 = vsub.s32 %v828, %v854
        %v856 = vrot.slane %v811, %v855
        %v857 = vsel %vm833, %v856, %v852
        %v858 = vlaneseq
        %v859 = vshrl.u32 %v858, 7
        %v860 = vsub.s32 %v835, %v859
        %v861 = vrot.slane %v812, %v860
        %v862 = vsel %vm840, %v861, %v857
        %v863 = vlaneseq
        %v864 = vshrl.u32 %v863, 7
        %v865 = vsub.s32 %v842, %v864
        %v866 = vrot.slane %v813, %v865
        %v867 = vsel %vm847, %v866, %v862
        %vm868 = vcmask 1041409
        %v869 = vsel %vm868, %v867, %v848
        %v879 = vlaneseq
        %v880 = vshrl.u32 %v879, 7
        %v881 = vsub.s32 %v823, %v880
        %v882 = vrot.slane %v798, %v881
        %v883 = vlaneseq
        %v884 = vshrl.u32 %v883, 7
        %v885 = vsub.s32 %v828, %v884
        %v886 = vrot.slane %v799, %v885
        %v887 = vsel %vm833, %v886, %v882
        %v888 = vlaneseq
        %v889 = vshrl.u32 %v888, 7
        %v890 = vsub.s32 %v835, %v889
        %v891 = vrot.slane %v800, %v890
        %v892 = vsel %vm840, %v891, %v887
        %v893 = vlaneseq
        %v894 = vshrl.u32 %v893, 7
        %v895 = vsub.s32 %v842, %v894
        %v896 = vrot.slane %v801, %v895
        %v897 = vsel %vm847, %v896, %v892
        %v898 = vlaneseq
        %v899 = vshrl.u32 %v898, 7
        %v900 = vsub.s32 %v823, %v899
        %v901 = vrot.slane %v802, %v900
        %v902 = vlaneseq
        %v903 = vshrl.u32 %v902, 7
        %v904 = vsub.s32 %v828, %v903
        %v905 = vrot.slane %v803, %v904
        %v906 = vsel %vm833, %v905, %v901
        %v907 = vlaneseq
        %v908 = vshrl.u32 %v907, 7
        %v909 = vsub.s32 %v835, %v908
        %v910 = vrot.slane %v804, %v909
        %v911 = vsel %vm840, %v910, %v906
        %v912 = vlaneseq
        %v913 = vshrl.u32 %v912, 7
        %v914 = vsub.s32 %v842, %v913
        %v915 = vrot.slane %v805, %v914
        %v916 = vsel %vm847, %v915, %v911
        %vm917 = vcmask 1043459
        %v918 = vsel %vm917, %v916, %v897
        %vm920 = vcmask 1041408
        %v921 = vsel %vm920, %v869, %v918
        %v922 = vld [vmem:[%s1] sm:$0xff]
        %v923 = vld [vmem:[%s1 + $0x8] sm:$0xff]
        %v924 = vld [vmem:[%s1 + $0x10] sm:$0xff]
        %v925 = vld [vmem:[%s1 + $0x18] sm:$0xff]
        %v926 = vld [vmem:[#allocation5] sm:$0x1]
        %v928 = vlaneseq
        %v929 = vshrl.u32 %v928, 7
        %v930 = vsub.s32 0, %v929
        %v931 = vrot.slane %v926, %v930
        %vm933 = vcmask 261120
        %v935 = vsel %vm933, %v921, 0
        %937 = vmatprep.subr.mxu0 0.0
        %v938 = vand.u32 %v922, 4294901760
        %939 = vmatpush1.msra.mxu0 %v938
        %940 = vmatprep.subr.mxu0 0.0
        %v941 = vand.u32 %v923, 4294901760
        %942 = vmatpush1.msra.mxu0 %v941
        %943 = vmatprep.subr.mxu0 0.0
        %v944 = vand.u32 %v924, 4294901760
        %945 = vmatpush1.msra.mxu0 %v944
        %946 = vmatprep.subr.mxu0 0.0
        %v947 = vand.u32 %v925, 4294901760
        %948 = vmatpush1.msra.mxu0 %v947
        %949 = vmatprep.subr.mxu0 0.0
        %950 = vmatpush1.msra.mxu0 0.0
        %951 = vmatprep.subr.mxu0 0.0
        %952 = vmatpush1.msra.mxu0 0.0
        %953 = vmatprep.subr.mxu0 0.0
        %954 = vmatpush1.msra.mxu0 0.0
        %955 = vmatprep.subr.mxu0 0.0
        %956 = vmatpush1.msra.mxu0 0.0
        %957 = vmatprep.subr.mxu0 0.0
        %958 = vmatpush1.msra.mxu0 0.0
        %959 = vmatprep.subr.mxu0 0.0
        %960 = vmatpush1.msra.mxu0 0.0
        %961 = vmatprep.subr.mxu0 0.0
        %962 = vmatpush1.msra.mxu0 0.0
        %963 = vmatprep.subr.mxu0 0.0
        %964 = vmatpush1.msra.mxu0 0.0
        %965 = vmatprep.subr.mxu0 0.0
        %966 = vmatpush1.msra.mxu0 0.0
        %967 = vmatprep.subr.mxu0 0.0
        %968 = vmatpush1.msra.mxu0 0.0
        %969 = vmatprep.subr.mxu0 0.0
        %970 = vmatpush1.msra.mxu0 0.0
        %971 = vmatprep.subr.mxu0 0.0
        %972 = vmatpush1.msra.mxu0 0.0
        %973 = vmatprep.subr.mxu0 0.0
        %974 = vmatpush1.msra.mxu0 0.0
        %975 = vmatprep.subr.mxu0 0.0
        %976 = vmatpush1.msra.mxu0 0.0
        %977 = vmatprep.subr.mxu0 0.0
        %978 = vmatpush1.msra.mxu0 0.0
        %979 = vmatprep.subr.mxu0 0.0
        %980 = vmatpush1.msra.mxu0 0.0
        %981 = vmatprep.subr.mxu0 0.0
        %982 = vmatpush1.msra.mxu0 0.0
        %983 = vmatprep.subr.mxu0 0.0
        %984 = vmatpush1.msra.mxu0 0.0
        %985 = vmatprep.subr.mxu0 0.0
        %986 = vmatpush1.msra.mxu0 0.0
        %987 = vmatprep.subr.mxu0 0.0
        %988 = vmatpush1.msra.mxu0 0.0
        %989 = vmatprep.subr.mxu0 0.0
        %990 = vmatpush1.msra.mxu0 0.0
        %991 = vmatprep.subr.mxu0 0.0
        %992 = vmatpush1.msra.mxu0 0.0
        %993 = vmatprep.subr.mxu0 0.0
        %994 = vmatpush1.msra.mxu0 0.0
        %995 = vmatprep.subr.mxu0 0.0
        %996 = vmatpush1.msra.mxu0 0.0
        %997 = vmatprep.subr.mxu0 0.0
        %998 = vmatpush1.msra.mxu0 0.0
        %999 = vmatprep.subr.mxu0 0.0
        %1000 = vmatpush1.msra.mxu0 0.0
        %1001 = vmatprep.subr.mxu0 0.0
        %1002 = vmatpush1.msra.mxu0 0.0
        %1003 = vmatprep.subr.mxu0 0.0
        %1004 = vmatpush1.msra.mxu0 0.0
        %1005 = vmatprep.mubr.f32.mxu0 0.0
        %v1006 = vand.u32 %v935, 4294901760
        %v1007 = vsub.f32 %v935, %v1006
        %v1008 = vand.u32 %v1007, 4294901760
        %v1009 = vsub.f32 %v1007, %v1008
        %v1010 = vand.u32 %v1009, 4294901760
        %1011 = vmatmul.mubr.f32.gmra.mrb[0].mxu0 %v1010
        %v1012 = vpop.f32.mrb[0].mxu0
        %v1013 = vadd.f32 %v931, %v1012
        %v1014 = vpop.f32.mrb[0].mxu0
        %1015 = vdwg.mxu0
        %1016 = vmatprep.subr.mxu0 0.0
        %v1017 = vand.u32 %v922, 4294901760
        %v1018 = vsub.f32 %v922, %v1017
        %v1019 = vand.u32 %v1018, 4294901760
        %v1020 = vsub.f32 %v1018, %v1019
        %v1021 = vand.u32 %v1020, 4294901760
        %1022 = vmatpush1.msra.mxu0 %v1021
        %1023 = vmatprep.subr.mxu0 0.0
        %v1024 = vand.u32 %v923, 4294901760
        %v1025 = vsub.f32 %v923, %v1024
        %v1026 = vand.u32 %v1025, 4294901760
        %v1027 = vsub.f32 %v1025, %v1026
        %v1028 = vand.u32 %v1027, 4294901760
        %1029 = vmatpush1.msra.mxu0 %v1028
        %1030 = vmatprep.subr.mxu0 0.0
        %v1031 = vand.u32 %v924, 4294901760
        %v1032 = vsub.f32 %v924, %v1031
        %v1033 = vand.u32 %v1032, 4294901760
        %v1034 = vsub.f32 %v1032, %v1033
        %v1035 = vand.u32 %v1034, 4294901760
        %1036 = vmatpush1.msra.mxu0 %v1035
        %1037 = vmatprep.subr.mxu0 0.0
        %v1038 = vand.u32 %v925, 4294901760
        %v1039 = vsub.f32 %v925, %v1038
        %v1040 = vand.u32 %v1039, 4294901760
        %v1041 = vsub.f32 %v1039, %v1040
        %v1042 = vand.u32 %v1041, 4294901760
        %1043 = vmatpush1.msra.mxu0 %v1042
        %1044 = vmatprep.subr.mxu0 0.0
        %1045 = vmatpush1.msra.mxu0 0.0
        %1046 = vmatprep.subr.mxu0 0.0
        %1047 = vmatpush1.msra.mxu0 0.0
        %1048 = vmatprep.subr.mxu0 0.0
        %1049 = vmatpush1.msra.mxu0 0.0
        %1050 = vmatprep.subr.mxu0 0.0
        %1051 = vmatpush1.msra.mxu0 0.0
        %1052 = vmatprep.subr.mxu0 0.0
        %1053 = vmatpush1.msra.mxu0 0.0
        %1054 = vmatprep.subr.mxu0 0.0
        %1055 = vmatpush1.msra.mxu0 0.0
        %1056 = vmatprep.subr.mxu0 0.0
        %1057 = vmatpush1.msra.mxu0 0.0
        %1058 = vmatprep.subr.mxu0 0.0
        %1059 = vmatpush1.msra.mxu0 0.0
        %1060 = vmatprep.subr.mxu0 0.0
        %1061 = vmatpush1.msra.mxu0 0.0
        %1062 = vmatprep.subr.mxu0 0.0
        %1063 = vmatpush1.msra.mxu0 0.0
        %1064 = vmatprep.subr.mxu0 0.0
        %1065 = vmatpush1.msra.mxu0 0.0
        %1066 = vmatprep.subr.mxu0 0.0
        %1067 = vmatpush1.msra.mxu0 0.0
        %1068 = vmatprep.subr.mxu0 0.0
        %1069 = vmatpush1.msra.mxu0 0.0
        %1070 = vmatprep.subr.mxu0 0.0
        %1071 = vmatpush1.msra.mxu0 0.0
        %1072 = vmatprep.subr.mxu0 0.0
        %1073 = vmatpush1.msra.mxu0 0.0
        %1074 = vmatprep.subr.mxu0 0.0
        %1075 = vmatpush1.msra.mxu0 0.0
        %1076 = vmatprep.subr.mxu0 0.0
        %1077 = vmatpush1.msra.mxu0 0.0
        %1078 = vmatprep.subr.mxu0 0.0
        %1079 = vmatpush1.msra.mxu0 0.0
        %1080 = vmatprep.subr.mxu0 0.0
        %1081 = vmatpush1.msra.mxu0 0.0
        %1082 = vmatprep.subr.mxu0 0.0
        %1083 = vmatpush1.msra.mxu0 0.0
        %1084 = vmatprep.subr.mxu0 0.0
        %1085 = vmatpush1.msra.mxu0 0.0
        %1086 = vmatprep.subr.mxu0 0.0
        %1087 = vmatpush1.msra.mxu0 0.0
        %1088 = vmatprep.subr.mxu0 0.0
        %1089 = vmatpush1.msra.mxu0 0.0
        %1090 = vmatprep.subr.mxu0 0.0
        %1091 = vmatpush1.msra.mxu0 0.0
        %1092 = vmatprep.subr.mxu0 0.0
        %1093 = vmatpush1.msra.mxu0 0.0
        %1094 = vmatprep.subr.mxu0 0.0
        %1095 = vmatpush1.msra.mxu0 0.0
        %1096 = vmatprep.subr.mxu0 0.0
        %1097 = vmatpush1.msra.mxu0 0.0
        %1098 = vmatprep.subr.mxu0 0.0
        %1099 = vmatpush1.msra.mxu0 0.0
        %1100 = vmatprep.mubr.f32.mxu0 0.0
        %v1101 = vand.u32 %v935, 4294901760
        %1102 = vmatmul.mubr.f32.gmra.mrb[0].mxu0 %v1101
        %v1103 = vpop.f32.mrb[0].mxu0
        %v1104 = vadd.f32 %v1013, %v1103
        %v1105 = vpop.f32.mrb[0].mxu0
        %1106 = vdwg.mxu0
        %1107 = vmatprep.subr.mxu0 0.0
        %v1108 = vand.u32 %v922, 4294901760
        %v1109 = vsub.f32 %v922, %v1108
        %1110 = vmatpush1.msra.mxu0 %v1109
        %1111 = vmatprep.subr.mxu0 0.0
        %v1112 = vand.u32 %v923, 4294901760
        %v1113 = vsub.f32 %v923, %v1112
        %1114 = vmatpush1.msra.mxu0 %v1113
        %1115 = vmatprep.subr.mxu0 0.0
        %v1116 = vand.u32 %v924, 4294901760
        %v1117 = vsub.f32 %v924, %v1116
        %1118 = vmatpush1.msra.mxu0 %v1117
        %1119 = vmatprep.subr.mxu0 0.0
        %v1120 = vand.u32 %v925, 4294901760
        %v1121 = vsub.f32 %v925, %v1120
        %1122 = vmatpush1.msra.mxu0 %v1121
        %1123 = vmatprep.subr.mxu0 0.0
        %1124 = vmatpush1.msra.mxu0 0.0
        %1125 = vmatprep.subr.mxu0 0.0
        %1126 = vmatpush1.msra.mxu0 0.0
        %1127 = vmatprep.subr.mxu0 0.0
        %1128 = vmatpush1.msra.mxu0 0.0
        %1129 = vmatprep.subr.mxu0 0.0
        %1130 = vmatpush1.msra.mxu0 0.0
        %1131 = vmatprep.subr.mxu0 0.0
        %1132 = vmatpush1.msra.mxu0 0.0
        %1133 = vmatprep.subr.mxu0 0.0
        %1134 = vmatpush1.msra.mxu0 0.0
        %1135 = vmatprep.subr.mxu0 0.0
        %1136 = vmatpush1.msra.mxu0 0.0
        %1137 = vmatprep.subr.mxu0 0.0
        %1138 = vmatpush1.msra.mxu0 0.0
        %1139 = vmatprep.subr.mxu0 0.0
        %1140 = vmatpush1.msra.mxu0 0.0
        %1141 = vmatprep.subr.mxu0 0.0
        %1142 = vmatpush1.msra.mxu0 0.0
        %1143 = vmatprep.subr.mxu0 0.0
        %1144 = vmatpush1.msra.mxu0 0.0
        %1145 = vmatprep.subr.mxu0 0.0
        %1146 = vmatpush1.msra.mxu0 0.0
        %1147 = vmatprep.subr.mxu0 0.0
        %1148 = vmatpush1.msra.mxu0 0.0
        %1149 = vmatprep.subr.mxu0 0.0
        %1150 = vmatpush1.msra.mxu0 0.0
        %1151 = vmatprep.subr.mxu0 0.0
        %1152 = vmatpush1.msra.mxu0 0.0
        %1153 = vmatprep.subr.mxu0 0.0
        %1154 = vmatpush1.msra.mxu0 0.0
        %1155 = vmatprep.subr.mxu0 0.0
        %1156 = vmatpush1.msra.mxu0 0.0
        %1157 = vmatprep.subr.mxu0 0.0
        %1158 = vmatpush1.msra.mxu0 0.0
        %1159 = vmatprep.subr.mxu0 0.0
        %1160 = vmatpush1.msra.mxu0 0.0
        %1161 = vmatprep.subr.mxu0 0.0
        %1162 = vmatpush1.msra.mxu0 0.0
        %1163 = vmatprep.subr.mxu0 0.0
        %1164 = vmatpush1.msra.mxu0 0.0
        %1165 = vmatprep.subr.mxu0 0.0
        %1166 = vmatpush1.msra.mxu0 0.0
        %1167 = vmatprep.subr.mxu0 0.0
        %1168 = vmatpush1.msra.mxu0 0.0
        %1169 = vmatprep.subr.mxu0 0.0
        %1170 = vmatpush1.msra.mxu0 0.0
        %1171 = vmatprep.subr.mxu0 0.0
        %1172 = vmatpush1.msra.mxu0 0.0
        %1173 = vmatprep.subr.mxu0 0.0
        %1174 = vmatpush1.msra.mxu0 0.0
        %1175 = vmatprep.subr.mxu0 0.0
        %1176 = vmatpush1.msra.mxu0 0.0
        %1177 = vmatprep.subr.mxu0 0.0
        %1178 = vmatpush1.msra.mxu0 0.0
        %1179 = vmatprep.mubr.f32.mxu0 0.0
        %v1180 = vand.u32 %v935, 4294901760
        %v1181 = vsub.f32 %v935, %v1180
        %1182 = vmatmul.mubr.f32.gmra.mrb[0].mxu0 %v1181
        %v1183 = vpop.f32.mrb[0].mxu0
        %v1184 = vadd.f32 %v1104, %v1183
        %v1185 = vpop.f32.mrb[0].mxu0
        %1186 = vdwg.mxu0
        %1187 = vmatprep.subr.mxu0 0.0
        %v1188 = vand.u32 %v922, 4294901760
        %1189 = vmatpush1.msra.mxu0 %v1188
        %1190 = vmatprep.subr.mxu0 0.0
        %v1191 = vand.u32 %v923, 4294901760
        %1192 = vmatpush1.msra.mxu0 %v1191
        %1193 = vmatprep.subr.mxu0 0.0
        %v1194 = vand.u32 %v924, 4294901760
        %1195 = vmatpush1.msra.mxu0 %v1194
        %1196 = vmatprep.subr.mxu0 0.0
        %v1197 = vand.u32 %v925, 4294901760
        %1198 = vmatpush1.msra.mxu0 %v1197
        %1199 = vmatprep.subr.mxu0 0.0
        %1200 = vmatpush1.msra.mxu0 0.0
        %1201 = vmatprep.subr.mxu0 0.0
        %1202 = vmatpush1.msra.mxu0 0.0
        %1203 = vmatprep.subr.mxu0 0.0
        %1204 = vmatpush1.msra.mxu0 0.0
        %1205 = vmatprep.subr.mxu0 0.0
        %1206 = vmatpush1.msra.mxu0 0.0
        %1207 = vmatprep.subr.mxu0 0.0
        %1208 = vmatpush1.msra.mxu0 0.0
        %1209 = vmatprep.subr.mxu0 0.0
        %1210 = vmatpush1.msra.mxu0 0.0
        %1211 = vmatprep.subr.mxu0 0.0
        %1212 = vmatpush1.msra.mxu0 0.0
        %1213 = vmatprep.subr.mxu0 0.0
        %1214 = vmatpush1.msra.mxu0 0.0
        %1215 = vmatprep.subr.mxu0 0.0
        %1216 = vmatpush1.msra.mxu0 0.0
        %1217 = vmatprep.subr.mxu0 0.0
        %1218 = vmatpush1.msra.mxu0 0.0
        %1219 = vmatprep.subr.mxu0 0.0
        %1220 = vmatpush1.msra.mxu0 0.0
        %1221 = vmatprep.subr.mxu0 0.0
        %1222 = vmatpush1.msra.mxu0 0.0
        %1223 = vmatprep.subr.mxu0 0.0
        %1224 = vmatpush1.msra.mxu0 0.0
        %1225 = vmatprep.subr.mxu0 0.0
        %1226 = vmatpush1.msra.mxu0 0.0
        %1227 = vmatprep.subr.mxu0 0.0
        %1228 = vmatpush1.msra.mxu0 0.0
        %1229 = vmatprep.subr.mxu0 0.0
        %1230 = vmatpush1.msra.mxu0 0.0
        %1231 = vmatprep.subr.mxu0 0.0
        %1232 = vmatpush1.msra.mxu0 0.0
        %1233 = vmatprep.subr.mxu0 0.0
        %1234 = vmatpush1.msra.mxu0 0.0
        %1235 = vmatprep.subr.mxu0 0.0
        %1236 = vmatpush1.msra.mxu0 0.0
        %1237 = vmatprep.subr.mxu0 0.0
        %1238 = vmatpush1.msra.mxu0 0.0
        %1239 = vmatprep.subr.mxu0 0.0
        %1240 = vmatpush1.msra.mxu0 0.0
        %1241 = vmatprep.subr.mxu0 0.0
        %1242 = vmatpush1.msra.mxu0 0.0
        %1243 = vmatprep.subr.mxu0 0.0
        %1244 = vmatpush1.msra.mxu0 0.0
        %1245 = vmatprep.subr.mxu0 0.0
        %1246 = vmatpush1.msra.mxu0 0.0
        %1247 = vmatprep.subr.mxu0 0.0
        %1248 = vmatpush1.msra.mxu0 0.0
        %1249 = vmatprep.subr.mxu0 0.0
        %1250 = vmatpush1.msra.mxu0 0.0
        %1251 = vmatprep.subr.mxu0 0.0
        %1252 = vmatpush1.msra.mxu0 0.0
        %1253 = vmatprep.subr.mxu0 0.0
        %1254 = vmatpush1.msra.mxu0 0.0
        %1255 = vmatprep.mubr.f32.mxu0 0.0
        %v1256 = vand.u32 %v935, 4294901760
        %v1257 = vsub.f32 %v935, %v1256
        %v1258 = vand.u32 %v1257, 4294901760
        %1259 = vmatmul.mubr.f32.gmra.mrb[0].mxu0 %v1258
        %v1260 = vpop.f32.mrb[0].mxu0
        %v1261 = vadd.f32 %v1184, %v1260
        %v1262 = vpop.f32.mrb[0].mxu0
        %1263 = vdwg.mxu0
        %1264 = vmatprep.subr.mxu0 0.0
        %v1265 = vand.u32 %v922, 4294901760
        %v1266 = vsub.f32 %v922, %v1265
        %v1267 = vand.u32 %v1266, 4294901760
        %1268 = vmatpush1.msra.mxu0 %v1267
        %1269 = vmatprep.subr.mxu0 0.0
        %v1270 = vand.u32 %v923, 4294901760
        %v1271 = vsub.f32 %v923, %v1270
        %v1272 = vand.u32 %v1271, 4294901760
        %1273 = vmatpush1.msra.mxu0 %v1272
        %1274 = vmatprep.subr.mxu0 0.0
        %v1275 = vand.u32 %v924, 4294901760
        %v1276 = vsub.f32 %v924, %v1275
        %v1277 = vand.u32 %v1276, 4294901760
        %1278 = vmatpush1.msra.mxu0 %v1277
        %1279 = vmatprep.subr.mxu0 0.0
        %v1280 = vand.u32 %v925, 4294901760
        %v1281 = vsub.f32 %v925, %v1280
        %v1282 = vand.u32 %v1281, 4294901760
        %1283 = vmatpush1.msra.mxu0 %v1282
        %1284 = vmatprep.subr.mxu0 0.0
        %1285 = vmatpush1.msra.mxu0 0.0
        %1286 = vmatprep.subr.mxu0 0.0
        %1287 = vmatpush1.msra.mxu0 0.0
        %1288 = vmatprep.subr.mxu0 0.0
        %1289 = vmatpush1.msra.mxu0 0.0
        %1290 = vmatprep.subr.mxu0 0.0
        %1291 = vmatpush1.msra.mxu0 0.0
        %1292 = vmatprep.subr.mxu0 0.0
        %1293 = vmatpush1.msra.mxu0 0.0
        %1294 = vmatprep.subr.mxu0 0.0
        %1295 = vmatpush1.msra.mxu0 0.0
        %1296 = vmatprep.subr.mxu0 0.0
        %1297 = vmatpush1.msra.mxu0 0.0
        %1298 = vmatprep.subr.mxu0 0.0
        %1299 = vmatpush1.msra.mxu0 0.0
        %1300 = vmatprep.subr.mxu0 0.0
        %1301 = vmatpush1.msra.mxu0 0.0
        %1302 = vmatprep.subr.mxu0 0.0
        %1303 = vmatpush1.msra.mxu0 0.0
        %1304 = vmatprep.subr.mxu0 0.0
        %1305 = vmatpush1.msra.mxu0 0.0
        %1306 = vmatprep.subr.mxu0 0.0
        %1307 = vmatpush1.msra.mxu0 0.0
        %1308 = vmatprep.subr.mxu0 0.0
        %1309 = vmatpush1.msra.mxu0 0.0
        %1310 = vmatprep.subr.mxu0 0.0
        %1311 = vmatpush1.msra.mxu0 0.0
        %1312 = vmatprep.subr.mxu0 0.0
        %1313 = vmatpush1.msra.mxu0 0.0
        %1314 = vmatprep.subr.mxu0 0.0
        %1315 = vmatpush1.msra.mxu0 0.0
        %1316 = vmatprep.subr.mxu0 0.0
        %1317 = vmatpush1.msra.mxu0 0.0
        %1318 = vmatprep.subr.mxu0 0.0
        %1319 = vmatpush1.msra.mxu0 0.0
        %1320 = vmatprep.subr.mxu0 0.0
        %1321 = vmatpush1.msra.mxu0 0.0
        %1322 = vmatprep.subr.mxu0 0.0
        %1323 = vmatpush1.msra.mxu0 0.0
        %1324 = vmatprep.subr.mxu0 0.0
        %1325 = vmatpush1.msra.mxu0 0.0
        %1326 = vmatprep.subr.mxu0 0.0
        %1327 = vmatpush1.msra.mxu0 0.0
        %1328 = vmatprep.subr.mxu0 0.0
        %1329 = vmatpush1.msra.mxu0 0.0
        %1330 = vmatprep.subr.mxu0 0.0
        %1331 = vmatpush1.msra.mxu0 0.0
        %1332 = vmatprep.subr.mxu0 0.0
        %1333 = vmatpush1.msra.mxu0 0.0
        %1334 = vmatprep.subr.mxu0 0.0
        %1335 = vmatpush1.msra.mxu0 0.0
        %1336 = vmatprep.subr.mxu0 0.0
        %1337 = vmatpush1.msra.mxu0 0.0
        %1338 = vmatprep.subr.mxu0 0.0
        %1339 = vmatpush1.msra.mxu0 0.0
        %1340 = vmatprep.mubr.f32.mxu0 0.0
        %v1341 = vand.u32 %v935, 4294901760
        %1342 = vmatmul.mubr.f32.gmra.mrb[0].mxu0 %v1341
        %v1343 = vpop.f32.mrb[0].mxu0
        %v1344 = vadd.f32 %v1261, %v1343
        %v1345 = vpop.f32.mrb[0].mxu0
        %1346 = vdwg.mxu0
        %1347 = vmatprep.subr.mxu0 0.0
        %v1348 = vand.u32 %v922, 4294901760
        %1349 = vmatpush1.msra.mxu0 %v1348
        %1350 = vmatprep.subr.mxu0 0.0
        %v1351 = vand.u32 %v923, 4294901760
        %1352 = vmatpush1.msra.mxu0 %v1351
        %1353 = vmatprep.subr.mxu0 0.0
        %v1354 = vand.u32 %v924, 4294901760
        %1355 = vmatpush1.msra.mxu0 %v1354
        %1356 = vmatprep.subr.mxu0 0.0
        %v1357 = vand.u32 %v925, 4294901760
        %1358 = vmatpush1.msra.mxu0 %v1357
        %1359 = vmatprep.subr.mxu0 0.0
        %1360 = vmatpush1.msra.mxu0 0.0
        %1361 = vmatprep.subr.mxu0 0.0
        %1362 = vmatpush1.msra.mxu0 0.0
        %1363 = vmatprep.subr.mxu0 0.0
        %1364 = vmatpush1.msra.mxu0 0.0
        %1365 = vmatprep.subr.mxu0 0.0
        %1366 = vmatpush1.msra.mxu0 0.0
        %1367 = vmatprep.subr.mxu0 0.0
        %1368 = vmatpush1.msra.mxu0 0.0
        %1369 = vmatprep.subr.mxu0 0.0
        %1370 = vmatpush1.msra.mxu0 0.0
        %1371 = vmatprep.subr.mxu0 0.0
        %1372 = vmatpush1.msra.mxu0 0.0
        %1373 = vmatprep.subr.mxu0 0.0
        %1374 = vmatpush1.msra.mxu0 0.0
        %1375 = vmatprep.subr.mxu0 0.0
        %1376 = vmatpush1.msra.mxu0 0.0
        %1377 = vmatprep.subr.mxu0 0.0
        %1378 = vmatpush1.msra.mxu0 0.0
        %1379 = vmatprep.subr.mxu0 0.0
        %1380 = vmatpush1.msra.mxu0 0.0
        %1381 = vmatprep.subr.mxu0 0.0
        %1382 = vmatpush1.msra.mxu0 0.0
        %1383 = vmatprep.subr.mxu0 0.0
        %1384 = vmatpush1.msra.mxu0 0.0
        %1385 = vmatprep.subr.mxu0 0.0
        %1386 = vmatpush1.msra.mxu0 0.0
        %1387 = vmatprep.subr.mxu0 0.0
        %1388 = vmatpush1.msra.mxu0 0.0
        %1389 = vmatprep.subr.mxu0 0.0
        %1390 = vmatpush1.msra.mxu0 0.0
        %1391 = vmatprep.subr.mxu0 0.0
        %1392 = vmatpush1.msra.mxu0 0.0
        %1393 = vmatprep.subr.mxu0 0.0
        %1394 = vmatpush1.msra.mxu0 0.0
        %1395 = vmatprep.subr.mxu0 0.0
        %1396 = vmatpush1.msra.mxu0 0.0
        %1397 = vmatprep.subr.mxu0 0.0
        %1398 = vmatpush1.msra.mxu0 0.0
        %1399 = vmatprep.subr.mxu0 0.0
        %1400 = vmatpush1.msra.mxu0 0.0
        %1401 = vmatprep.subr.mxu0 0.0
        %1402 = vmatpush1.msra.mxu0 0.0
        %1403 = vmatprep.subr.mxu0 0.0
        %1404 = vmatpush1.msra.mxu0 0.0
        %1405 = vmatprep.subr.mxu0 0.0
        %1406 = vmatpush1.msra.mxu0 0.0
        %1407 = vmatprep.subr.mxu0 0.0
        %1408 = vmatpush1.msra.mxu0 0.0
        %1409 = vmatprep.subr.mxu0 0.0
        %1410 = vmatpush1.msra.mxu0 0.0
        %1411 = vmatprep.subr.mxu0 0.0
        %1412 = vmatpush1.msra.mxu0 0.0
        %1413 = vmatprep.subr.mxu0 0.0
        %1414 = vmatpush1.msra.mxu0 0.0
        %1415 = vmatprep.mubr.f32.mxu0 0.0
        %v1416 = vand.u32 %v935, 4294901760
        %1417 = vmatmul.mubr.f32.gmra.mrb[0].mxu0 %v1416
        %v1418 = vpop.f32.mrb[0].mxu0
        %v1419 = vadd.f32 %v1344, %v1418
        %v1420 = vpop.f32.mrb[0].mxu0
        %1421 = vdwg.mxu0
        %v1422 = vmax.f32 %v1419, 0.0
        %v1423 = vld [vmem:[#allocation7] sm:$0x3]
        %v1424 = vld [vmem:[#allocation8] sm:$0x1]
        %v1426 = vlaneseq
        %v1427 = vshrl.u32 %v1426, 7
        %v1428 = vsub.s32 0, %v1427
        %v1429 = vrot.slane %v1424, %v1428
        %vm1431 = vcmask 15360
        %v1433 = vsel %vm1431, %v1422, 0
        %v1436 = vsel %vm920, %v1423, 0
        %1438 = vmatprep.subr.mxu0 0.0
        %v1439 = vand.u32 %v1436, 4294901760
        %1440 = vmatpush1.msra.mxu0 %v1439
        %1441 = vmatprep.subr.mxu0 0.0
        %1442 = vmatpush1.msra.mxu0 0.0
        %1443 = vmatprep.subr.mxu0 0.0
        %1444 = vmatpush1.msra.mxu0 0.0
        %1445 = vmatprep.subr.mxu0 0.0
        %1446 = vmatpush1.msra.mxu0 0.0
        %1447 = vmatprep.subr.mxu0 0.0
        %1448 = vmatpush1.msra.mxu0 0.0
        %1449 = vmatprep.subr.mxu0 0.0
        %1450 = vmatpush1.msra.mxu0 0.0
        %1451 = vmatprep.subr.mxu0 0.0
        %1452 = vmatpush1.msra.mxu0 0.0
        %1453 = vmatprep.subr.mxu0 0.0
        %1454 = vmatpush1.msra.mxu0 0.0
        %1455 = vmatprep.subr.mxu0 0.0
        %1456 = vmatpush1.msra.mxu0 0.0
        %1457 = vmatprep.subr.mxu0 0.0
        %1458 = vmatpush1.msra.mxu0 0.0
        %1459 = vmatprep.subr.mxu0 0.0
        %1460 = vmatpush1.msra.mxu0 0.0
        %1461 = vmatprep.subr.mxu0 0.0
        %1462 = vmatpush1.msra.mxu0 0.0
        %1463 = vmatprep.subr.mxu0 0.0
        %1464 = vmatpush1.msra.mxu0 0.0
        %1465 = vmatprep.subr.mxu0 0.0
        %1466 = vmatpush1.msra.mxu0 0.0
        %1467 = vmatprep.subr.mxu0 0.0
        %1468 = vmatpush1.msra.mxu0 0.0
        %1469 = vmatprep.subr.mxu0 0.0
        %1470 = vmatpush1.msra.mxu0 0.0
        %1471 = vmatprep.subr.mxu0 0.0
        %1472 = vmatpush1.msra.mxu0 0.0
        %1473 = vmatprep.subr.mxu0 0.0
        %1474 = vmatpush1.msra.mxu0 0.0
        %1475 = vmatprep.subr.mxu0 0.0
        %1476 = vmatpush1.msra.mxu0 0.0
        %1477 = vmatprep.subr.mxu0 0.0
        %1478 = vmatpush1.msra.mxu0 0.0
        %1479 = vmatprep.subr.mxu0 0.0
        %1480 = vmatpush1.msra.mxu0 0.0
        %1481 = vmatprep.subr.mxu0 0.0
        %1482 = vmatpush1.msra.mxu0 0.0
        %1483 = vmatprep.subr.mxu0 0.0
        %1484 = vmatpush1.msra.mxu0 0.0
        %1485 = vmatprep.subr.mxu0 0.0
        %1486 = vmatpush1.msra.mxu0 0.0
        %1487 = vmatprep.subr.mxu0 0.0
        %1488 = vmatpush1.msra.mxu0 0.0
        %1489 = vmatprep.subr.mxu0 0.0
        %1490 = vmatpush1.msra.mxu0 0.0
        %1491 = vmatprep.subr.mxu0 0.0
        %1492 = vmatpush1.msra.mxu0 0.0
        %1493 = vmatprep.subr.mxu0 0.0
        %1494 = vmatpush1.msra.mxu0 0.0
        %1495 = vmatprep.subr.mxu0 0.0
        %1496 = vmatpush1.msra.mxu0 0.0
        %1497 = vmatprep.subr.mxu0 0.0
        %1498 = vmatpush1.msra.mxu0 0.0
        %1499 = vmatprep.subr.mxu0 0.0
        %1500 = vmatpush1.msra.mxu0 0.0
        %1501 = vmatprep.subr.mxu0 0.0
        %1502 = vmatpush1.msra.mxu0 0.0
        %1503 = vmatprep.mubr.f32.mxu0 0.0
        %v1504 = vand.u32 %v1433, 4294901760
        %v1505 = vsub.f32 %v1433, %v1504
        %v1506 = vand.u32 %v1505, 4294901760
        %v1507 = vsub.f32 %v1505, %v1506
        %v1508 = vand.u32 %v1507, 4294901760
        %1509 = vmatmul.mubr.f32.gmra.mrb[0].mxu0 %v1508
        %v1510 = vpop.f32.mrb[0].mxu0
        %v1511 = vadd.f32 %v1429, %v1510
        %v1512 = vpop.f32.mrb[0].mxu0
        %1513 = vdwg.mxu0
        %1514 = vmatprep.subr.mxu0 0.0
        %v1515 = vand.u32 %v1436, 4294901760
        %v1516 = vsub.f32 %v1436, %v1515
        %v1517 = vand.u32 %v1516, 4294901760
        %v1518 = vsub.f32 %v1516, %v1517
        %v1519 = vand.u32 %v1518, 4294901760
        %1520 = vmatpush1.msra.mxu0 %v1519
        %1521 = vmatprep.subr.mxu0 0.0
        %1522 = vmatpush1.msra.mxu0 0.0
        %1523 = vmatprep.subr.mxu0 0.0
        %1524 = vmatpush1.msra.mxu0 0.0
        %1525 = vmatprep.subr.mxu0 0.0
        %1526 = vmatpush1.msra.mxu0 0.0
        %1527 = vmatprep.subr.mxu0 0.0
        %1528 = vmatpush1.msra.mxu0 0.0
        %1529 = vmatprep.subr.mxu0 0.0
        %1530 = vmatpush1.msra.mxu0 0.0
        %1531 = vmatprep.subr.mxu0 0.0
        %1532 = vmatpush1.msra.mxu0 0.0
        %1533 = vmatprep.subr.mxu0 0.0
        %1534 = vmatpush1.msra.mxu0 0.0
        %1535 = vmatprep.subr.mxu0 0.0
        %1536 = vmatpush1.msra.mxu0 0.0
        %1537 = vmatprep.subr.mxu0 0.0
        %1538 = vmatpush1.msra.mxu0 0.0
        %1539 = vmatprep.subr.mxu0 0.0
        %1540 = vmatpush1.msra.mxu0 0.0
        %1541 = vmatprep.subr.mxu0 0.0
        %1542 = vmatpush1.msra.mxu0 0.0
        %1543 = vmatprep.subr.mxu0 0.0
        %1544 = vmatpush1.msra.mxu0 0.0
        %1545 = vmatprep.subr.mxu0 0.0
        %1546 = vmatpush1.msra.mxu0 0.0
        %1547 = vmatprep.subr.mxu0 0.0
        %1548 = vmatpush1.msra.mxu0 0.0
        %1549 = vmatprep.subr.mxu0 0.0
        %1550 = vmatpush1.msra.mxu0 0.0
        %1551 = vmatprep.subr.mxu0 0.0
        %1552 = vmatpush1.msra.mxu0 0.0
        %1553 = vmatprep.subr.mxu0 0.0
        %1554 = vmatpush1.msra.mxu0 0.0
        %1555 = vmatprep.subr.mxu0 0.0
        %1556 = vmatpush1.msra.mxu0 0.0
        %1557 = vmatprep.subr.mxu0 0.0
        %1558 = vmatpush1.msra.mxu0 0.0
        %1559 = vmatprep.subr.mxu0 0.0
        %1560 = vmatpush1.msra.mxu0 0.0
        %1561 = vmatprep.subr.mxu0 0.0
        %1562 = vmatpush1.msra.mxu0 0.0
        %1563 = vmatprep.subr.mxu0 0.0
        %1564 = vmatpush1.msra.mxu0 0.0
        %1565 = vmatprep.subr.mxu0 0.0
        %1566 = vmatpush1.msra.mxu0 0.0
        %1567 = vmatprep.subr.mxu0 0.0
        %1568 = vmatpush1.msra.mxu0 0.0
        %1569 = vmatprep.subr.mxu0 0.0
        %1570 = vmatpush1.msra.mxu0 0.0
        %1571 = vmatprep.subr.mxu0 0.0
        %1572 = vmatpush1.msra.mxu0 0.0
        %1573 = vmatprep.subr.mxu0 0.0
        %1574 = vmatpush1.msra.mxu0 0.0
        %1575 = vmatprep.subr.mxu0 0.0
        %1576 = vmatpush1.msra.mxu0 0.0
        %1577 = vmatprep.subr.mxu0 0.0
        %1578 = vmatpush1.msra.mxu0 0.0
        %1579 = vmatprep.subr.mxu0 0.0
        %1580 = vmatpush1.msra.mxu0 0.0
        %1581 = vmatprep.subr.mxu0 0.0
        %1582 = vmatpush1.msra.mxu0 0.0
        %1583 = vmatprep.mubr.f32.mxu0 0.0
        %v1584 = vand.u32 %v1433, 4294901760
        %1585 = vmatmul.mubr.f32.gmra.mrb[0].mxu0 %v1584
        %v1586 = vpop.f32.mrb[0].mxu0
        %v1587 = vadd.f32 %v1511, %v1586
        %v1588 = vpop.f32.mrb[0].mxu0
        %1589 = vdwg.mxu0
        %1590 = vmatprep.subr.mxu0 0.0
        %v1591 = vand.u32 %v1436, 4294901760
        %v1592 = vsub.f32 %v1436, %v1591
        %1593 = vmatpush1.msra.mxu0 %v1592
        %1594 = vmatprep.subr.mxu0 0.0
        %1595 = vmatpush1.msra.mxu0 0.0
        %1596 = vmatprep.subr.mxu0 0.0
        %1597 = vmatpush1.msra.mxu0 0.0
        %1598 = vmatprep.subr.mxu0 0.0
        %1599 = vmatpush1.msra.mxu0 0.0
        %1600 = vmatprep.subr.mxu0 0.0
        %1601 = vmatpush1.msra.mxu0 0.0
        %1602 = vmatprep.subr.mxu0 0.0
        %1603 = vmatpush1.msra.mxu0 0.0
        %1604 = vmatprep.subr.mxu0 0.0
        %1605 = vmatpush1.msra.mxu0 0.0
        %1606 = vmatprep.subr.mxu0 0.0
        %1607 = vmatpush1.msra.mxu0 0.0
        %1608 = vmatprep.subr.mxu0 0.0
        %1609 = vmatpush1.msra.mxu0 0.0
        %1610 = vmatprep.subr.mxu0 0.0
        %1611 = vmatpush1.msra.mxu0 0.0
        %1612 = vmatprep.subr.mxu0 0.0
        %1613 = vmatpush1.msra.mxu0 0.0
        %1614 = vmatprep.subr.mxu0 0.0
        %1615 = vmatpush1.msra.mxu0 0.0
        %1616 = vmatprep.subr.mxu0 0.0
        %1617 = vmatpush1.msra.mxu0 0.0
        %1618 = vmatprep.subr.mxu0 0.0
        %1619 = vmatpush1.msra.mxu0 0.0
        %1620 = vmatprep.subr.mxu0 0.0
        %1621 = vmatpush1.msra.mxu0 0.0
        %1622 = vmatprep.subr.mxu0 0.0
        %1623 = vmatpush1.msra.mxu0 0.0
        %1624 = vmatprep.subr.mxu0 0.0
        %1625 = vmatpush1.msra.mxu0 0.0
        %1626 = vmatprep.subr.mxu0 0.0
        %1627 = vmatpush1.msra.mxu0 0.0
        %1628 = vmatprep.subr.mxu0 0.0
        %1629 = vmatpush1.msra.mxu0 0.0
        %1630 = vmatprep.subr.mxu0 0.0
        %1631 = vmatpush1.msra.mxu0 0.0
        %1632 = vmatprep.subr.mxu0 0.0
        %1633 = vmatpush1.msra.mxu0 0.0
        %1634 = vmatprep.subr.mxu0 0.0
        %1635 = vmatpush1.msra.mxu0 0.0
        %1636 = vmatprep.subr.mxu0 0.0
        %1637 = vmatpush1.msra.mxu0 0.0
        %1638 = vmatprep.subr.mxu0 0.0
        %1639 = vmatpush1.msra.mxu0 0.0
        %1640 = vmatprep.subr.mxu0 0.0
        %1641 = vmatpush1.msra.mxu0 0.0
        %1642 = vmatprep.subr.mxu0 0.0
        %1643 = vmatpush1.msra.mxu0 0.0
        %1644 = vmatprep.subr.mxu0 0.0
        %1645 = vmatpush1.msra.mxu0 0.0
        %1646 = vmatprep.subr.mxu0 0.0
        %1647 = vmatpush1.msra.mxu0 0.0
        %1648 = vmatprep.subr.mxu0 0.0
        %1649 = vmatpush1.msra.mxu0 0.0
        %1650 = vmatprep.subr.mxu0 0.0
        %1651 = vmatpush1.msra.mxu0 0.0
        %1652 = vmatprep.subr.mxu0 0.0
        %1653 = vmatpush1.msra.mxu0 0.0
        %1654 = vmatprep.subr.mxu0 0.0
        %1655 = vmatpush1.msra.mxu0 0.0
        %1656 = vmatprep.mubr.f32.mxu0 0.0
        %v1657 = vand.u32 %v1433, 4294901760
        %v1658 = vsub.f32 %v1433, %v1657
        %1659 = vmatmul.mubr.f32.gmra.mrb[0].mxu0 %v1658
        %v1660 = vpop.f32.mrb[0].mxu0
        %v1661 = vadd.f32 %v1587, %v1660
        %v1662 = vpop.f32.mrb[0].mxu0
        %1663 = vdwg.mxu0
        %1664 = vmatprep.subr.mxu0 0.0
        %v1665 = vand.u32 %v1436, 4294901760
        %1666 = vmatpush1.msra.mxu0 %v1665
        %1667 = vmatprep.subr.mxu0 0.0
        %1668 = vmatpush1.msra.mxu0 0.0
        %1669 = vmatprep.subr.mxu0 0.0
        %1670 = vmatpush1.msra.mxu0 0.0
        %1671 = vmatprep.subr.mxu0 0.0
        %1672 = vmatpush1.msra.mxu0 0.0
        %1673 = vmatprep.subr.mxu0 0.0
        %1674 = vmatpush1.msra.mxu0 0.0
        %1675 = vmatprep.subr.mxu0 0.0
        %1676 = vmatpush1.msra.mxu0 0.0
        %1677 = vmatprep.subr.mxu0 0.0
        %1678 = vmatpush1.msra.mxu0 0.0
        %1679 = vmatprep.subr.mxu0 0.0
        %1680 = vmatpush1.msra.mxu0 0.0
        %1681 = vmatprep.subr.mxu0 0.0
        %1682 = vmatpush1.msra.mxu0 0.0
        %1683 = vmatprep.subr.mxu0 0.0
        %1684 = vmatpush1.msra.mxu0 0.0
        %1685 = vmatprep.subr.mxu0 0.0
        %1686 = vmatpush1.msra.mxu0 0.0
        %1687 = vmatprep.subr.mxu0 0.0
        %1688 = vmatpush1.msra.mxu0 0.0
        %1689 = vmatprep.subr.mxu0 0.0
        %1690 = vmatpush1.msra.mxu0 0.0
        %1691 = vmatprep.subr.mxu0 0.0
        %1692 = vmatpush1.msra.mxu0 0.0
        %1693 = vmatprep.subr.mxu0 0.0
        %1694 = vmatpush1.msra.mxu0 0.0
        %1695 = vmatprep.subr.mxu0 0.0
        %1696 = vmatpush1.msra.mxu0 0.0
        %1697 = vmatprep.subr.mxu0 0.0
        %1698 = vmatpush1.msra.mxu0 0.0
        %1699 = vmatprep.subr.mxu0 0.0
        %1700 = vmatpush1.msra.mxu0 0.0
        %1701 = vmatprep.subr.mxu0 0.0
        %1702 = vmatpush1.msra.mxu0 0.0
        %1703 = vmatprep.subr.mxu0 0.0
        %1704 = vmatpush1.msra.mxu0 0.0
        %1705 = vmatprep.subr.mxu0 0.0
        %1706 = vmatpush1.msra.mxu0 0.0
        %1707 = vmatprep.subr.mxu0 0.0
        %1708 = vmatpush1.msra.mxu0 0.0
        %1709 = vmatprep.subr.mxu0 0.0
        %1710 = vmatpush1.msra.mxu0 0.0
        %1711 = vmatprep.subr.mxu0 0.0
        %1712 = vmatpush1.msra.mxu0 0.0
        %1713 = vmatprep.subr.mxu0 0.0
        %1714 = vmatpush1.msra.mxu0 0.0
        %1715 = vmatprep.subr.mxu0 0.0
        %1716 = vmatpush1.msra.mxu0 0.0
        %1717 = vmatprep.subr.mxu0 0.0
        %1718 = vmatpush1.msra.mxu0 0.0
        %1719 = vmatprep.subr.mxu0 0.0
        %1720 = vmatpush1.msra.mxu0 0.0
        %1721 = vmatprep.subr.mxu0 0.0
        %1722 = vmatpush1.msra.mxu0 0.0
        %1723 = vmatprep.subr.mxu0 0.0
        %1724 = vmatpush1.msra.mxu0 0.0
        %1725 = vmatprep.subr.mxu0 0.0
        %1726 = vmatpush1.msra.mxu0 0.0
        %1727 = vmatprep.subr.mxu0 0.0
        %1728 = vmatpush1.msra.mxu0 0.0
        %1729 = vmatprep.mubr.f32.mxu0 0.0
        %v1730 = vand.u32 %v1433, 4294901760
        %v1731 = vsub.f32 %v1433, %v1730
        %v1732 = vand.u32 %v1731, 4294901760
        %1733 = vmatmul.mubr.f32.gmra.mrb[0].mxu0 %v1732
        %v1734 = vpop.f32.mrb[0].mxu0
        %v1735 = vadd.f32 %v1661, %v1734
        %v1736 = vpop.f32.mrb[0].mxu0
        %1737 = vdwg.mxu0
        %1738 = vmatprep.subr.mxu0 0.0
        %v1739 = vand.u32 %v1436, 4294901760
        %v1740 = vsub.f32 %v1436, %v1739
        %v1741 = vand.u32 %v1740, 4294901760
        %1742 = vmatpush1.msra.mxu0 %v1741
        %1743 = vmatprep.subr.mxu0 0.0
        %1744 = vmatpush1.msra.mxu0 0.0
        %1745 = vmatprep.subr.mxu0 0.0
        %1746 = vmatpush1.msra.mxu0 0.0
        %1747 = vmatprep.subr.mxu0 0.0
        %1748 = vmatpush1.msra.mxu0 0.0
        %1749 = vmatprep.subr.mxu0 0.0
        %1750 = vmatpush1.msra.mxu0 0.0
        %1751 = vmatprep.subr.mxu0 0.0
        %1752 = vmatpush1.msra.mxu0 0.0
        %1753 = vmatprep.subr.mxu0 0.0
        %1754 = vmatpush1.msra.mxu0 0.0
        %1755 = vmatprep.subr.mxu0 0.0
        %1756 = vmatpush1.msra.mxu0 0.0
        %1757 = vmatprep.subr.mxu0 0.0
        %1758 = vmatpush1.msra.mxu0 0.0
        %1759 = vmatprep.subr.mxu0 0.0
        %1760 = vmatpush1.msra.mxu0 0.0
        %1761 = vmatprep.subr.mxu0 0.0
        %1762 = vmatpush1.msra.mxu0 0.0
        %1763 = vmatprep.subr.mxu0 0.0
        %1764 = vmatpush1.msra.mxu0 0.0
        %1765 = vmatprep.subr.mxu0 0.0
        %1766 = vmatpush1.msra.mxu0 0.0
        %1767 = vmatprep.subr.mxu0 0.0
        %1768 = vmatpush1.msra.mxu0 0.0
        %1769 = vmatprep.subr.mxu0 0.0
        %1770 = vmatpush1.msra.mxu0 0.0
        %1771 = vmatprep.subr.mxu0 0.0
        %1772 = vmatpush1.msra.mxu0 0.0
        %1773 = vmatprep.subr.mxu0 0.0
        %1774 = vmatpush1.msra.mxu0 0.0
        %1775 = vmatprep.subr.mxu0 0.0
        %1776 = vmatpush1.msra.mxu0 0.0
        %1777 = vmatprep.subr.mxu0 0.0
        %1778 = vmatpush1.msra.mxu0 0.0
        %1779 = vmatprep.subr.mxu0 0.0
        %1780 = vmatpush1.msra.mxu0 0.0
        %1781 = vmatprep.subr.mxu0 0.0
        %1782 = vmatpush1.msra.mxu0 0.0
        %1783 = vmatprep.subr.mxu0 0.0
        %1784 = vmatpush1.msra.mxu0 0.0
        %1785 = vmatprep.subr.mxu0 0.0
        %1786 = vmatpush1.msra.mxu0 0.0
        %1787 = vmatprep.subr.mxu0 0.0
        %1788 = vmatpush1.msra.mxu0 0.0
        %1789 = vmatprep.subr.mxu0 0.0
        %1790 = vmatpush1.msra.mxu0 0.0
        %1791 = vmatprep.subr.mxu0 0.0
        %1792 = vmatpush1.msra.mxu0 0.0
        %1793 = vmatprep.subr.mxu0 0.0
        %1794 = vmatpush1.msra.mxu0 0.0
        %1795 = vmatprep.subr.mxu0 0.0
        %1796 = vmatpush1.msra.mxu0 0.0
        %1797 = vmatprep.subr.mxu0 0.0
        %1798 = vmatpush1.msra.mxu0 0.0
        %1799 = vmatprep.subr.mxu0 0.0
        %1800 = vmatpush1.msra.mxu0 0.0
        %1801 = vmatprep.subr.mxu0 0.0
        %1802 = vmatpush1.msra.mxu0 0.0
        %1803 = vmatprep.subr.mxu0 0.0
        %1804 = vmatpush1.msra.mxu0 0.0
        %1805 = vmatprep.mubr.f32.mxu0 0.0
        %v1806 = vand.u32 %v1433, 4294901760
        %1807 = vmatmul.mubr.f32.gmra.mrb[0].mxu0 %v1806
        %v1808 = vpop.f32.mrb[0].mxu0
        %v1809 = vadd.f32 %v1735, %v1808
        %v1810 = vpop.f32.mrb[0].mxu0
        %1811 = vdwg.mxu0
        %1812 = vmatprep.subr.mxu0 0.0
        %v1813 = vand.u32 %v1436, 4294901760
        %1814 = vmatpush1.msra.mxu0 %v1813
        %1815 = vmatprep.subr.mxu0 0.0
        %1816 = vmatpush1.msra.mxu0 0.0
        %1817 = vmatprep.subr.mxu0 0.0
        %1818 = vmatpush1.msra.mxu0 0.0
        %1819 = vmatprep.subr.mxu0 0.0
        %1820 = vmatpush1.msra.mxu0 0.0
        %1821 = vmatprep.subr.mxu0 0.0
        %1822 = vmatpush1.msra.mxu0 0.0
        %1823 = vmatprep.subr.mxu0 0.0
        %1824 = vmatpush1.msra.mxu0 0.0
        %1825 = vmatprep.subr.mxu0 0.0
        %1826 = vmatpush1.msra.mxu0 0.0
        %1827 = vmatprep.subr.mxu0 0.0
        %1828 = vmatpush1.msra.mxu0 0.0
        %1829 = vmatprep.subr.mxu0 0.0
        %1830 = vmatpush1.msra.mxu0 0.0
        %1831 = vmatprep.subr.mxu0 0.0
        %1832 = vmatpush1.msra.mxu0 0.0
        %1833 = vmatprep.subr.mxu0 0.0
        %1834 = vmatpush1.msra.mxu0 0.0
        %1835 = vmatprep.subr.mxu0 0.0
        %1836 = vmatpush1.msra.mxu0 0.0
        %1837 = vmatprep.subr.mxu0 0.0
        %1838 = vmatpush1.msra.mxu0 0.0
        %1839 = vmatprep.subr.mxu0 0.0
        %1840 = vmatpush1.msra.mxu0 0.0
        %1841 = vmatprep.subr.mxu0 0.0
        %1842 = vmatpush1.msra.mxu0 0.0
        %1843 = vmatprep.subr.mxu0 0.0
        %1844 = vmatpush1.msra.mxu0 0.0
        %1845 = vmatprep.subr.mxu0 0.0
        %1846 = vmatpush1.msra.mxu0 0.0
        %1847 = vmatprep.subr.mxu0 0.0
        %1848 = vmatpush1.msra.mxu0 0.0
        %1849 = vmatprep.subr.mxu0 0.0
        %1850 = vmatpush1.msra.mxu0 0.0
        %1851 = vmatprep.subr.mxu0 0.0
        %1852 = vmatpush1.msra.mxu0 0.0
        %1853 = vmatprep.subr.mxu0 0.0
        %1854 = vmatpush1.msra.mxu0 0.0
        %1855 = vmatprep.subr.mxu0 0.0
        %1856 = vmatpush1.msra.mxu0 0.0
        %1857 = vmatprep.subr.mxu0 0.0
        %1858 = vmatpush1.msra.mxu0 0.0
        %1859 = vmatprep.subr.mxu0 0.0
        %1860 = vmatpush1.msra.mxu0 0.0
        %1861 = vmatprep.subr.mxu0 0.0
        %1862 = vmatpush1.msra.mxu0 0.0
        %1863 = vmatprep.subr.mxu0 0.0
        %1864 = vmatpush1.msra.mxu0 0.0
        %1865 = vmatprep.subr.mxu0 0.0
        %1866 = vmatpush1.msra.mxu0 0.0
        %1867 = vmatprep.subr.mxu0 0.0
        %1868 = vmatpush1.msra.mxu0 0.0
        %1869 = vmatprep.subr.mxu0 0.0
        %1870 = vmatpush1.msra.mxu0 0.0
        %1871 = vmatprep.subr.mxu0 0.0
        %1872 = vmatpush1.msra.mxu0 0.0
        %1873 = vmatprep.subr.mxu0 0.0
        %1874 = vmatpush1.msra.mxu0 0.0
        %1875 = vmatprep.subr.mxu0 0.0
        %1876 = vmatpush1.msra.mxu0 0.0
        %1877 = vmatprep.mubr.f32.mxu0 0.0
        %v1878 = vand.u32 %v1433, 4294901760
        %1879 = vmatmul.mubr.f32.gmra.mrb[0].mxu0 %v1878
        %v1880 = vpop.f32.mrb[0].mxu0
        %v1881 = vadd.f32 %v1809, %v1880
        %v1882 = vpop.f32.mrb[0].mxu0
        %1883 = vdwg.mxu0
        %v1885 = vrot.slane %v1881, 2
        %v1887 = vadd.f32 %v1881, %v1885
        %v1888 = vxor.u32 %v1887, 2147483648
        %v1889 = vmul.f32 %v1888, 1.442695
        %v1890 = vpow.pop %v1889
        %v1891 = vadd.f32 %v1890, 1.0
        %v1892 = vrcp.pop %v1891
        %v1893 = vmul.f32 1.0, %v1892
        %v1894 = vld [vmem:[%s243] sm:$0xff]
        %v1895 = vld [vmem:[%s243 + $0x8] sm:$0xff]
        %v1896 = vld [vmem:[%s243 + $0x10] sm:$0xff]
        %v1897 = vld [vmem:[%s243 + $0x18] sm:$0xff]
        %v1898 = vld [vmem:[%s243 + $0x20] sm:$0xff]
        %v1899 = vld [vmem:[%s243 + $0x28] sm:$0xff]
        %v1900 = vld [vmem:[%s243 + $0x30] sm:$0xff]
        %v1901 = vld [vmem:[%s243 + $0x38] sm:$0xff]
        %v1902 = vld [vmem:[%s243 + $0x40] sm:$0xff]
        %v1903 = vld [vmem:[%s243 + $0x48] sm:$0xff]
        %v1904 = vld [vmem:[%s243 + $0x50] sm:$0xff]
        %v1905 = vld [vmem:[%s243 + $0x58] sm:$0xff]
        %v1906 = vld [vmem:[%s243 + $0x60] sm:$0xff]
        %v1907 = vld [vmem:[%s243 + $0x68] sm:$0xff]
        %v1908 = vld [vmem:[%s243 + $0x70] sm:$0xff]
        %v1909 = vld [vmem:[%s243 + $0x78] sm:$0xff]
        %v1910 = vld [vmem:[%s243 + $0x80] sm:$0xff]
        %v1911 = vld [vmem:[%s243 + $0x88] sm:$0xff]
        %v1912 = vld [vmem:[%s243 + $0x90] sm:$0xff]
        %v1913 = vld [vmem:[%s243 + $0x98] sm:$0xff]
        %v1914 = vld [vmem:[%s243 + $0xa0] sm:$0xff]
        %v1915 = vld [vmem:[%s243 + $0xa8] sm:$0xff]
        %v1916 = vld [vmem:[%s243 + $0xb0] sm:$0xff]
        %v1917 = vld [vmem:[%s243 + $0xb8] sm:$0xff]
        %v1918 = vld [vmem:[%s243 + $0xc0] sm:$0xff]
        %v1919 = vld [vmem:[%s243 + $0xc8] sm:$0xff]
        %v1920 = vld [vmem:[%s243 + $0xd0] sm:$0xff]
        %v1921 = vld [vmem:[%s243 + $0xd8] sm:$0xff]
        %v1922 = vld [vmem:[%s243 + $0xe0] sm:$0xff]
        %v1923 = vld [vmem:[%s243 + $0xe8] sm:$0xff]
        %v1924 = vld [vmem:[%s243 + $0xf0] sm:$0xff]
        %v1925 = vld [vmem:[%s243 + $0xf8] sm:$0xff]
        %v1926 = vld [vmem:[%s243 + $0x100] sm:$0xff]
        %v1927 = vld [vmem:[%s243 + $0x108] sm:$0xff]
        %v1928 = vld [vmem:[%s243 + $0x110] sm:$0xff]
        %v1929 = vld [vmem:[%s243 + $0x118] sm:$0xff]
        %v1930 = vld [vmem:[%s243 + $0x120] sm:$0xff]
        %v1931 = vld [vmem:[%s243 + $0x128] sm:$0xff]
        %v1932 = vld [vmem:[%s243 + $0x130] sm:$0xff]
        %v1933 = vld [vmem:[%s243 + $0x138] sm:$0xff]
        %v1934 = vld [vmem:[%s243 + $0x140] sm:$0xff]
        %v1935 = vld [vmem:[%s243 + $0x148] sm:$0xff]
        %v1936 = vld [vmem:[%s243 + $0x150] sm:$0xff]
        %v1937 = vld [vmem:[%s243 + $0x158] sm:$0xff]
        %v1938 = vld [vmem:[%s243 + $0x160] sm:$0xff]
        %v1939 = vld [vmem:[%s243 + $0x168] sm:$0xff]
        %v1940 = vld [vmem:[%s243 + $0x170] sm:$0xff]
        %v1941 = vld [vmem:[%s243 + $0x178] sm:$0xff]
        %v1942 = vld [vmem:[%s243 + $0x180] sm:$0xff]
        %v1943 = vld [vmem:[%s243 + $0x188] sm:$0xff]
        %v1944 = vld [vmem:[%s243 + $0x190] sm:$0xff]
        %v1945 = vld [vmem:[%s243 + $0x198] sm:$0xff]
        %v1946 = vld [vmem:[%s243 + $0x1a0] sm:$0xff]
        %v1947 = vld [vmem:[%s243 + $0x1a8] sm:$0xff]
        %v1948 = vld [vmem:[%s243 + $0x1b0] sm:$0xff]
        %v1949 = vld [vmem:[%s243 + $0x1b8] sm:$0xff]
        %v1950 = vld [vmem:[%s243 + $0x1c0] sm:$0xff]
        %v1951 = vld [vmem:[%s243 + $0x1c8] sm:$0xff]
        %v1952 = vld [vmem:[%s243 + $0x1d0] sm:$0xff]
        %v1953 = vld [vmem:[%s243 + $0x1d8] sm:$0xff]
        %v1954 = vld [vmem:[%s243 + $0x1e0] sm:$0xff]
        %v1955 = vld [vmem:[%s243 + $0x1e8] sm:$0xff]
        %v1956 = vld [vmem:[%s243 + $0x1f0] sm:$0xff]
        %v1957 = vld [vmem:[%s243 + $0x1f8] sm:$0xff]
        %v1958 = vld [vmem:[%s243 + $0x200] sm:$0xff]
        %v1959 = vld [vmem:[%s243 + $0x208] sm:$0xff]
        %v1960 = vld [vmem:[%s243 + $0x210] sm:$0xff]
        %v1961 = vld [vmem:[%s243 + $0x218] sm:$0xff]
        %v1962 = vld [vmem:[%s243 + $0x220] sm:$0xff]
        %v1963 = vld [vmem:[%s243 + $0x228] sm:$0xff]
        %v1964 = vld [vmem:[%s243 + $0x230] sm:$0xff]
        %v1965 = vld [vmem:[%s243 + $0x238] sm:$0xff]
        %v1966 = vld [vmem:[%s243 + $0x240] sm:$0xff]
        %v1967 = vld [vmem:[%s243 + $0x248] sm:$0xff]
        %v1968 = vld [vmem:[%s243 + $0x250] sm:$0xff]
        %v1969 = vld [vmem:[%s243 + $0x258] sm:$0xff]
        %v1970 = vld [vmem:[%s243 + $0x260] sm:$0xff]
        %v1971 = vld [vmem:[%s243 + $0x268] sm:$0xff]
        %v1972 = vld [vmem:[%s243 + $0x270] sm:$0xff]
        %v1973 = vld [vmem:[%s243 + $0x278] sm:$0xff]
        %v1974 = vld [vmem:[%s243 + $0x280] sm:$0xff]
        %v1975 = vld [vmem:[%s243 + $0x288] sm:$0xff]
        %v1976 = vld [vmem:[%s243 + $0x290] sm:$0xff]
        %v1977 = vld [vmem:[%s243 + $0x298] sm:$0xff]
        %v1978 = vld [vmem:[%s243 + $0x2a0] sm:$0xff]
        %v1979 = vld [vmem:[%s243 + $0x2a8] sm:$0xff]
        %v1980 = vld [vmem:[%s243 + $0x2b0] sm:$0xff]
        %v1981 = vld [vmem:[%s243 + $0x2b8] sm:$0xff]
        %v1982 = vld [vmem:[%s243 + $0x2c0] sm:$0xff]
        %v1983 = vld [vmem:[%s243 + $0x2c8] sm:$0xff]
        %v1984 = vld [vmem:[%s243 + $0x2d0] sm:$0xff]
        %v1985 = vld [vmem:[%s243 + $0x2d8] sm:$0xff]
        %v1986 = vld [vmem:[%s243 + $0x2e0] sm:$0xff]
        %v1987 = vld [vmem:[%s243 + $0x2e8] sm:$0xff]
        %v1988 = vld [vmem:[%s243 + $0x2f0] sm:$0xff]
        %v1989 = vld [vmem:[%s243 + $0x2f8] sm:$0xff]
        %v1990 = vld [vmem:[%s243 + $0x300] sm:$0xff]
        %v1991 = vld [vmem:[%s243 + $0x308] sm:$0xff]
        %v1992 = vld [vmem:[%s243 + $0x310] sm:$0xff]
        %v1993 = vld [vmem:[%s243 + $0x318] sm:$0xff]
        %v1994 = vld [vmem:[%s243 + $0x320] sm:$0xff]
        %v1995 = vld [vmem:[%s243 + $0x328] sm:$0xff]
        %v1996 = vld [vmem:[%s243 + $0x330] sm:$0xff]
        %v1997 = vld [vmem:[%s243 + $0x338] sm:$0xff]
        %v1998 = vld [vmem:[%s243 + $0x340] sm:$0xff]
        %v1999 = vld [vmem:[%s243 + $0x348] sm:$0xff]
        %v2000 = vld [vmem:[%s243 + $0x350] sm:$0xff]
        %v2001 = vld [vmem:[%s243 + $0x358] sm:$0xff]
        %v2002 = vld [vmem:[%s243 + $0x360] sm:$0xff]
        %v2003 = vld [vmem:[%s243 + $0x368] sm:$0xff]
        %v2004 = vld [vmem:[%s243 + $0x370] sm:$0xff]
        %v2005 = vld [vmem:[%s243 + $0x378] sm:$0xff]
        %v2006 = vld [vmem:[%s243 + $0x380] sm:$0xff]
        %v2007 = vld [vmem:[%s243 + $0x388] sm:$0xff]
        %v2008 = vld [vmem:[%s243 + $0x390] sm:$0xff]
        %v2009 = vld [vmem:[%s243 + $0x398] sm:$0xff]
        %v2010 = vld [vmem:[%s243 + $0x3a0] sm:$0xff]
        %v2011 = vld [vmem:[%s243 + $0x3a8] sm:$0xff]
        %v2012 = vld [vmem:[%s243 + $0x3b0] sm:$0xff]
        %v2013 = vld [vmem:[%s243 + $0x3b8] sm:$0xff]
        %v2014 = vld [vmem:[%s243 + $0x3c0] sm:$0xff]
        %v2015 = vld [vmem:[%s243 + $0x3c8] sm:$0xff]
        %v2016 = vld [vmem:[%s243 + $0x3d0] sm:$0xff]
        %v2017 = vld [vmem:[%s243 + $0x3d8] sm:$0xff]
        %v2018 = vld [vmem:[%s243 + $0x3e0] sm:$0xff]
        %v2019 = vld [vmem:[%s243 + $0x3e8] sm:$0xff]
        %v2020 = vld [vmem:[%s243 + $0x3f0] sm:$0xff]
        %v2021 = vld [vmem:[%s243 + $0x3f8] sm:$0xff]
        %v2022 = vld [vmem:[%s243 + $0x400] sm:$0xff]
        %v2023 = vld [vmem:[%s243 + $0x408] sm:$0xff]
        %v2024 = vld [vmem:[%s243 + $0x410] sm:$0xff]
        %v2025 = vld [vmem:[%s243 + $0x418] sm:$0xff]
        %v2026 = vld [vmem:[%s243 + $0x420] sm:$0xff]
        %v2027 = vld [vmem:[%s243 + $0x428] sm:$0xff]
        %v2028 = vld [vmem:[%s243 + $0x430] sm:$0xff]
        %v2029 = vld [vmem:[%s243 + $0x438] sm:$0xff]
        %v2030 = vld [vmem:[%s243 + $0x440] sm:$0xff]
        %v2031 = vld [vmem:[%s243 + $0x448] sm:$0xff]
        %v2032 = vld [vmem:[%s243 + $0x450] sm:$0xff]
        %v2033 = vld [vmem:[%s243 + $0x458] sm:$0xff]
        %v2034 = vld [vmem:[%s243 + $0x460] sm:$0xff]
        %v2035 = vld [vmem:[%s243 + $0x468] sm:$0xff]
        %v2036 = vld [vmem:[%s243 + $0x470] sm:$0xff]
        %v2037 = vld [vmem:[%s243 + $0x478] sm:$0xff]
        %v2038 = vlaneseq
        %v2039 = vshrl.u32 %v2038, 7
        %v2040 = vsub.s32 0, %v2039
        %v2041 = vrot.slane %v1893, %v2040
        %2043 = vbcast.lane.b32.xlu0 %v2041, 256
        %v2044 = vpop.permute.xlu0 %2043
        %s2046 = sor.u32 256, 8
        %2047 = vbcast.lane.b32.xlu0 %v2041, %s2046
        %v2048 = vpop.permute.xlu0 %2047
        %s2050 = sor.u32 256, 16
        %2051 = vbcast.lane.b32.xlu0 %v2041, %s2050
        %v2052 = vpop.permute.xlu0 %2051
        %s2054 = sor.u32 256, 24
        %2055 = vbcast.lane.b32.xlu0 %v2041, %s2054
        %v2056 = vpop.permute.xlu0 %2055
        %v2057 = vlaneseq
        %v2058 = vshrl.u32 %v2057, 7
        %v2059 = vsub.s32 1, %v2058
        %v2060 = vrot.slane %v1893, %v2059
        %2062 = vbcast.lane.b32.xlu0 %v2060, 256
        %v2063 = vpop.permute.xlu0 %2062
        %s2065 = sor.u32 256, 8
        %2066 = vbcast.lane.b32.xlu0 %v2060, %s2065
        %v2067 = vpop.permute.xlu0 %2066
        %s2069 = sor.u32 256, 16
        %2070 = vbcast.lane.b32.xlu0 %v2060, %s2069
        %v2071 = vpop.permute.xlu0 %2070
        %s2073 = sor.u32 256, 24
        %2074 = vbcast.lane.b32.xlu0 %v2060, %s2073
        %v2075 = vpop.permute.xlu0 %2074
        %v2076 = vmul.f32 %v1894, %v2044
        %v2077 = vmul.f32 %v1895, %v2044
        %v2078 = vmul.f32 %v1896, %v2044
        %v2079 = vmul.f32 %v1897, %v2044
        %v2080 = vmul.f32 %v1898, %v2044
        %v2081 = vmul.f32 %v1899, %v2044
        %v2082 = vmul.f32 %v1900, %v2044
        %v2083 = vmul.f32 %v1901, %v2044
        %v2084 = vmul.f32 %v1902, %v2044
        %v2085 = vmul.f32 %v1903, %v2044
        %v2086 = vmul.f32 %v1904, %v2044
        %v2087 = vmul.f32 %v1905, %v2044
        %v2088 = vmul.f32 %v1906, %v2044
        %v2089 = vmul.f32 %v1907, %v2044
        %v2090 = vmul.f32 %v1908, %v2044
        %v2091 = vmul.f32 %v1909, %v2044
        %v2092 = vmul.f32 %v1910, %v2044
        %v2093 = vmul.f32 %v1911, %v2044
        %v2094 = vmul.f32 %v1912, %v2048
        %v2095 = vmul.f32 %v1913, %v2048
        %v2096 = vmul.f32 %v1914, %v2048
        %v2097 = vmul.f32 %v1915, %v2048
        %v2098 = vmul.f32 %v1916, %v2048
        %v2099 = vmul.f32 %v1917, %v2048
        %v2100 = vmul.f32 %v1918, %v2048
        %v2101 = vmul.f32 %v1919, %v2048
        %v2102 = vmul.f32 %v1920, %v2048
        %v2103 = vmul.f32 %v1921, %v2048
        %v2104 = vmul.f32 %v1922, %v2048
        %v2105 = vmul.f32 %v1923, %v2048
        %v2106 = vmul.f32 %v1924, %v2048
        %v2107 = vmul.f32 %v1925, %v2048
        %v2108 = vmul.f32 %v1926, %v2048
        %v2109 = vmul.f32 %v1927, %v2048
        %v2110 = vmul.f32 %v1928, %v2048
        %v2111 = vmul.f32 %v1929, %v2048
        %v2112 = vmul.f32 %v1930, %v2052
        %v2113 = vmul.f32 %v1931, %v2052
        %v2114 = vmul.f32 %v1932, %v2052
        %v2115 = vmul.f32 %v1933, %v2052
        %v2116 = vmul.f32 %v1934, %v2052
        %v2117 = vmul.f32 %v1935, %v2052
        %v2118 = vmul.f32 %v1936, %v2052
        %v2119 = vmul.f32 %v1937, %v2052
        %v2120 = vmul.f32 %v1938, %v2052
        %v2121 = vmul.f32 %v1939, %v2052
        %v2122 = vmul.f32 %v1940, %v2052
        %v2123 = vmul.f32 %v1941, %v2052
        %v2124 = vmul.f32 %v1942, %v2052
        %v2125 = vmul.f32 %v1943, %v2052
        %v2126 = vmul.f32 %v1944, %v2052
        %v2127 = vmul.f32 %v1945, %v2052
        %v2128 = vmul.f32 %v1946, %v2052
        %v2129 = vmul.f32 %v1947, %v2052
        %v2130 = vmul.f32 %v1948, %v2056
        %v2131 = vmul.f32 %v1949, %v2056
        %v2132 = vmul.f32 %v1950, %v2056
        %v2133 = vmul.f32 %v1951, %v2056
        %v2134 = vmul.f32 %v1952, %v2056
        %v2135 = vmul.f32 %v1953, %v2056
        %v2136 = vmul.f32 %v1954, %v2056
        %v2137 = vmul.f32 %v1955, %v2056
        %v2138 = vmul.f32 %v1956, %v2056
        %v2139 = vmul.f32 %v1957, %v2056
        %v2140 = vmul.f32 %v1958, %v2056
        %v2141 = vmul.f32 %v1959, %v2056
        %v2142 = vmul.f32 %v1960, %v2056
        %v2143 = vmul.f32 %v1961, %v2056
        %v2144 = vmul.f32 %v1962, %v2056
        %v2145 = vmul.f32 %v1963, %v2056
        %v2146 = vmul.f32 %v1964, %v2056
        %v2147 = vmul.f32 %v1965, %v2056
        %v2148 = vmul.f32 %v1966, %v2063
        %v2149 = vmul.f32 %v1967, %v2063
        %v2150 = vmul.f32 %v1968, %v2063
        %v2151 = vmul.f32 %v1969, %v2063
        %v2152 = vmul.f32 %v1970, %v2063
        %v2153 = vmul.f32 %v1971, %v2063
        %v2154 = vmul.f32 %v1972, %v2063
        %v2155 = vmul.f32 %v1973, %v2063
        %v2156 = vmul.f32 %v1974, %v2063
        %v2157 = vmul.f32 %v1975, %v2063
        %v2158 = vmul.f32 %v1976, %v2063
        %v2159 = vmul.f32 %v1977, %v2063
        %v2160 = vmul.f32 %v1978, %v2063
        %v2161 = vmul.f32 %v1979, %v2063
        %v2162 = vmul.f32 %v1980, %v2063
        %v2163 = vmul.f32 %v1981, %v2063
        %v2164 = vmul.f32 %v1982, %v2063
        %v2165 = vmul.f32 %v1983, %v2063
        %v2166 = vmul.f32 %v1984, %v2067
        %v2167 = vmul.f32 %v1985, %v2067
        %v2168 = vmul.f32 %v1986, %v2067
        %v2169 = vmul.f32 %v1987, %v2067
        %v2170 = vmul.f32 %v1988, %v2067
        %v2171 = vmul.f32 %v1989, %v2067
        %v2172 = vmul.f32 %v1990, %v2067
        %v2173 = vmul.f32 %v1991, %v2067
        %v2174 = vmul.f32 %v1992, %v2067
        %v2175 = vmul.f32 %v1993, %v2067
        %v2176 = vmul.f32 %v1994, %v2067
        %v2177 = vmul.f32 %v1995, %v2067
        %v2178 = vmul.f32 %v1996, %v2067
        %v2179 = vmul.f32 %v1997, %v2067
        %v2180 = vmul.f32 %v1998, %v2067
        %v2181 = vmul.f32 %v1999, %v2067
        %v2182 = vmul.f32 %v2000, %v2067
        %v2183 = vmul.f32 %v2001, %v2067
        %v2184 = vmul.f32 %v2002, %v2071
        %v2185 = vmul.f32 %v2003, %v2071
        %v2186 = vmul.f32 %v2004, %v2071
        %v2187 = vmul.f32 %v2005, %v2071
        %v2188 = vmul.f32 %v2006, %v2071
        %v2189 = vmul.f32 %v2007, %v2071
        %v2190 = vmul.f32 %v2008, %v2071
        %v2191 = vmul.f32 %v2009, %v2071
        %v2192 = vmul.f32 %v2010, %v2071
        %v2193 = vmul.f32 %v2011, %v2071
        %v2194 = vmul.f32 %v2012, %v2071
        %v2195 = vmul.f32 %v2013, %v2071
        %v2196 = vmul.f32 %v2014, %v2071
        %v2197 = vmul.f32 %v2015, %v2071
        %v2198 = vmul.f32 %v2016, %v2071
        %v2199 = vmul.f32 %v2017, %v2071
        %v2200 = vmul.f32 %v2018, %v2071
        %v2201 = vmul.f32 %v2019, %v2071
        %v2202 = vmul.f32 %v2020, %v2075
        %v2203 = vmul.f32 %v2021, %v2075
        %v2204 = vmul.f32 %v2022, %v2075
        %v2205 = vmul.f32 %v2023, %v2075
        %v2206 = vmul.f32 %v2024, %v2075
        %v2207 = vmul.f32 %v2025, %v2075
        %v2208 = vmul.f32 %v2026, %v2075
        %v2209 = vmul.f32 %v2027, %v2075
        %v2210 = vmul.f32 %v2028, %v2075
        %v2211 = vmul.f32 %v2029, %v2075
        %v2212 = vmul.f32 %v2030, %v2075
        %v2213 = vmul.f32 %v2031, %v2075
        %v2214 = vmul.f32 %v2032, %v2075
        %v2215 = vmul.f32 %v2033, %v2075
        %v2216 = vmul.f32 %v2034, %v2075
        %v2217 = vmul.f32 %v2035, %v2075
        %v2218 = vmul.f32 %v2036, %v2075
        %v2219 = vmul.f32 %v2037, %v2075
        %2220 = vst [vmem:[%s281] sm:$0xff] %v2076
        %2221 = vst [vmem:[%s281 + $0x8] sm:$0xff] %v2077
        %2222 = vst [vmem:[%s281 + $0x10] sm:$0xff] %v2078
        %2223 = vst [vmem:[%s281 + $0x18] sm:$0xff] %v2079
        %2224 = vst [vmem:[%s281 + $0x20] sm:$0xff] %v2080
        %2225 = vst [vmem:[%s281 + $0x28] sm:$0xff] %v2081
        %2226 = vst [vmem:[%s281 + $0x30] sm:$0xff] %v2082
        %2227 = vst [vmem:[%s281 + $0x38] sm:$0xff] %v2083
        %2228 = vst [vmem:[%s281 + $0x40] sm:$0xff] %v2084
        %2229 = vst [vmem:[%s281 + $0x48] sm:$0xff] %v2085
        %2230 = vst [vmem:[%s281 + $0x50] sm:$0xff] %v2086
        %2231 = vst [vmem:[%s281 + $0x58] sm:$0xff] %v2087
        %2232 = vst [vmem:[%s281 + $0x60] sm:$0xff] %v2088
        %2233 = vst [vmem:[%s281 + $0x68] sm:$0xff] %v2089
        %2234 = vst [vmem:[%s281 + $0x70] sm:$0xff] %v2090
        %2235 = vst [vmem:[%s281 + $0x78] sm:$0xff] %v2091
        %2236 = vst [vmem:[%s281 + $0x80] sm:$0xff] %v2092
        %2237 = vst [vmem:[%s281 + $0x88] sm:$0xff] %v2093
        %2238 = vst [vmem:[%s281 + $0x90] sm:$0xff] %v2094
        %2239 = vst [vmem:[%s281 + $0x98] sm:$0xff] %v2095
        %2240 = vst [vmem:[%s281 + $0xa0] sm:$0xff] %v2096
        %2241 = vst [vmem:[%s281 + $0xa8] sm:$0xff] %v2097
        %2242 = vst [vmem:[%s281 + $0xb0] sm:$0xff] %v2098
        %2243 = vst [vmem:[%s281 + $0xb8] sm:$0xff] %v2099
        %2244 = vst [vmem:[%s281 + $0xc0] sm:$0xff] %v2100
        %2245 = vst [vmem:[%s281 + $0xc8] sm:$0xff] %v2101
        %2246 = vst [vmem:[%s281 + $0xd0] sm:$0xff] %v2102
        %2247 = vst [vmem:[%s281 + $0xd8] sm:$0xff] %v2103
        %2248 = vst [vmem:[%s281 + $0xe0] sm:$0xff] %v2104
        %2249 = vst [vmem:[%s281 + $0xe8] sm:$0xff] %v2105
        %2250 = vst [vmem:[%s281 + $0xf0] sm:$0xff] %v2106
        %2251 = vst [vmem:[%s281 + $0xf8] sm:$0xff] %v2107
        %2252 = vst [vmem:[%s281 + $0x100] sm:$0xff] %v2108
        %2253 = vst [vmem:[%s281 + $0x108] sm:$0xff] %v2109
        %2254 = vst [vmem:[%s281 + $0x110] sm:$0xff] %v2110
        %2255 = vst [vmem:[%s281 + $0x118] sm:$0xff] %v2111
        %2256 = vst [vmem:[%s281 + $0x120] sm:$0xff] %v2112
        %2257 = vst [vmem:[%s281 + $0x128] sm:$0xff] %v2113
        %2258 = vst [vmem:[%s281 + $0x130] sm:$0xff] %v2114
        %2259 = vst [vmem:[%s281 + $0x138] sm:$0xff] %v2115
        %2260 = vst [vmem:[%s281 + $0x140] sm:$0xff] %v2116
        %2261 = vst [vmem:[%s281 + $0x148] sm:$0xff] %v2117
        %2262 = vst [vmem:[%s281 + $0x150] sm:$0xff] %v2118
        %2263 = vst [vmem:[%s281 + $0x158] sm:$0xff] %v2119
        %2264 = vst [vmem:[%s281 + $0x160] sm:$0xff] %v2120
        %2265 = vst [vmem:[%s281 + $0x168] sm:$0xff] %v2121
        %2266 = vst [vmem:[%s281 + $0x170] sm:$0xff] %v2122
        %2267 = vst [vmem:[%s281 + $0x178] sm:$0xff] %v2123
        %2268 = vst [vmem:[%s281 + $0x180] sm:$0xff] %v2124
        %2269 = vst [vmem:[%s281 + $0x188] sm:$0xff] %v2125
        %2270 = vst [vmem:[%s281 + $0x190] sm:$0xff] %v2126
        %2271 = vst [vmem:[%s281 + $0x198] sm:$0xff] %v2127
        %2272 = vst [vmem:[%s281 + $0x1a0] sm:$0xff] %v2128
        %2273 = vst [vmem:[%s281 + $0x1a8] sm:$0xff] %v2129
        %2274 = vst [vmem:[%s281 + $0x1b0] sm:$0xff] %v2130
        %2275 = vst [vmem:[%s281 + $0x1b8] sm:$0xff] %v2131
        %2276 = vst [vmem:[%s281 + $0x1c0] sm:$0xff] %v2132
        %2277 = vst [vmem:[%s281 + $0x1c8] sm:$0xff] %v2133
        %2278 = vst [vmem:[%s281 + $0x1d0] sm:$0xff] %v2134
        %2279 = vst [vmem:[%s281 + $0x1d8] sm:$0xff] %v2135
        %2280 = vst [vmem:[%s281 + $0x1e0] sm:$0xff] %v2136
        %2281 = vst [vmem:[%s281 + $0x1e8] sm:$0xff] %v2137
        %2282 = vst [vmem:[%s281 + $0x1f0] sm:$0xff] %v2138
        %2283 = vst [vmem:[%s281 + $0x1f8] sm:$0xff] %v2139
        %2284 = vst [vmem:[%s281 + $0x200] sm:$0xff] %v2140
        %2285 = vst [vmem:[%s281 + $0x208] sm:$0xff] %v2141
        %2286 = vst [vmem:[%s281 + $0x210] sm:$0xff] %v2142
        %2287 = vst [vmem:[%s281 + $0x218] sm:$0xff] %v2143
        %2288 = vst [vmem:[%s281 + $0x220] sm:$0xff] %v2144
        %2289 = vst [vmem:[%s281 + $0x228] sm:$0xff] %v2145
        %2290 = vst [vmem:[%s281 + $0x230] sm:$0xff] %v2146
        %2291 = vst [vmem:[%s281 + $0x238] sm:$0xff] %v2147
        %2292 = vst [vmem:[%s281 + $0x240] sm:$0xff] %v2148
        %2293 = vst [vmem:[%s281 + $0x248] sm:$0xff] %v2149
        %2294 = vst [vmem:[%s281 + $0x250] sm:$0xff] %v2150
        %2295 = vst [vmem:[%s281 + $0x258] sm:$0xff] %v2151
        %2296 = vst [vmem:[%s281 + $0x260] sm:$0xff] %v2152
        %2297 = vst [vmem:[%s281 + $0x268] sm:$0xff] %v2153
        %2298 = vst [vmem:[%s281 + $0x270] sm:$0xff] %v2154
        %2299 = vst [vmem:[%s281 + $0x278] sm:$0xff] %v2155
        %2300 = vst [vmem:[%s281 + $0x280] sm:$0xff] %v2156
        %2301 = vst [vmem:[%s281 + $0x288] sm:$0xff] %v2157
        %2302 = vst [vmem:[%s281 + $0x290] sm:$0xff] %v2158
        %2303 = vst [vmem:[%s281 + $0x298] sm:$0xff] %v2159
        %2304 = vst [vmem:[%s281 + $0x2a0] sm:$0xff] %v2160
        %2305 = vst [vmem:[%s281 + $0x2a8] sm:$0xff] %v2161
        %2306 = vst [vmem:[%s281 + $0x2b0] sm:$0xff] %v2162
        %2307 = vst [vmem:[%s281 + $0x2b8] sm:$0xff] %v2163
        %2308 = vst [vmem:[%s281 + $0x2c0] sm:$0xff] %v2164
        %2309 = vst [vmem:[%s281 + $0x2c8] sm:$0xff] %v2165
        %2310 = vst [vmem:[%s281 + $0x2d0] sm:$0xff] %v2166
        %2311 = vst [vmem:[%s281 + $0x2d8] sm:$0xff] %v2167
        %2312 = vst [vmem:[%s281 + $0x2e0] sm:$0xff] %v2168
        %2313 = vst [vmem:[%s281 + $0x2e8] sm:$0xff] %v2169
        %2314 = vst [vmem:[%s281 + $0x2f0] sm:$0xff] %v2170
        %2315 = vst [vmem:[%s281 + $0x2f8] sm:$0xff] %v2171
        %2316 = vst [vmem:[%s281 + $0x300] sm:$0xff] %v2172
        %2317 = vst [vmem:[%s281 + $0x308] sm:$0xff] %v2173
        %2318 = vst [vmem:[%s281 + $0x310] sm:$0xff] %v2174
        %2319 = vst [vmem:[%s281 + $0x318] sm:$0xff] %v2175
        %2320 = vst [vmem:[%s281 + $0x320] sm:$0xff] %v2176
        %2321 = vst [vmem:[%s281 + $0x328] sm:$0xff] %v2177
        %2322 = vst [vmem:[%s281 + $0x330] sm:$0xff] %v2178
        %2323 = vst [vmem:[%s281 + $0x338] sm:$0xff] %v2179
        %2324 = vst [vmem:[%s281 + $0x340] sm:$0xff] %v2180
        %2325 = vst [vmem:[%s281 + $0x348] sm:$0xff] %v2181
        %2326 = vst [vmem:[%s281 + $0x350] sm:$0xff] %v2182
        %2327 = vst [vmem:[%s281 + $0x358] sm:$0xff] %v2183
        %2328 = vst [vmem:[%s281 + $0x360] sm:$0xff] %v2184
        %2329 = vst [vmem:[%s281 + $0x368] sm:$0xff] %v2185
        %2330 = vst [vmem:[%s281 + $0x370] sm:$0xff] %v2186
        %2331 = vst [vmem:[%s281 + $0x378] sm:$0xff] %v2187
        %2332 = vst [vmem:[%s281 + $0x380] sm:$0xff] %v2188
        %2333 = vst [vmem:[%s281 + $0x388] sm:$0xff] %v2189
        %2334 = vst [vmem:[%s281 + $0x390] sm:$0xff] %v2190
        %2335 = vst [vmem:[%s281 + $0x398] sm:$0xff] %v2191
        %2336 = vst [vmem:[%s281 + $0x3a0] sm:$0xff] %v2192
        %2337 = vst [vmem:[%s281 + $0x3a8] sm:$0xff] %v2193
        %2338 = vst [vmem:[%s281 + $0x3b0] sm:$0xff] %v2194
        %2339 = vst [vmem:[%s281 + $0x3b8] sm:$0xff] %v2195
        %2340 = vst [vmem:[%s281 + $0x3c0] sm:$0xff] %v2196
        %2341 = vst [vmem:[%s281 + $0x3c8] sm:$0xff] %v2197
        %2342 = vst [vmem:[%s281 + $0x3d0] sm:$0xff] %v2198
        %2343 = vst [vmem:[%s281 + $0x3d8] sm:$0xff] %v2199
        %2344 = vst [vmem:[%s281 + $0x3e0] sm:$0xff] %v2200
        %2345 = vst [vmem:[%s281 + $0x3e8] sm:$0xff] %v2201
        %2346 = vst [vmem:[%s281 + $0x3f0] sm:$0xff] %v2202
        %2347 = vst [vmem:[%s281 + $0x3f8] sm:$0xff] %v2203
        %2348 = vst [vmem:[%s281 + $0x400] sm:$0xff] %v2204
        %2349 = vst [vmem:[%s281 + $0x408] sm:$0xff] %v2205
        %2350 = vst [vmem:[%s281 + $0x410] sm:$0xff] %v2206
        %2351 = vst [vmem:[%s281 + $0x418] sm:$0xff] %v2207
        %2352 = vst [vmem:[%s281 + $0x420] sm:$0xff] %v2208
        %2353 = vst [vmem:[%s281 + $0x428] sm:$0xff] %v2209
        %2354 = vst [vmem:[%s281 + $0x430] sm:$0xff] %v2210
        %2355 = vst [vmem:[%s281 + $0x438] sm:$0xff] %v2211
        %2356 = vst [vmem:[%s281 + $0x440] sm:$0xff] %v2212
        %2357 = vst [vmem:[%s281 + $0x448] sm:$0xff] %v2213
        %2358 = vst [vmem:[%s281 + $0x450] sm:$0xff] %v2214
        %2359 = vst [vmem:[%s281 + $0x458] sm:$0xff] %v2215
        %2360 = vst [vmem:[%s281 + $0x460] sm:$0xff] %v2216
        %2361 = vst [vmem:[%s281 + $0x468] sm:$0xff] %v2217
        %2362 = vst [vmem:[%s281 + $0x470] sm:$0xff] %v2218
        %2363 = vst [vmem:[%s281 + $0x478] sm:$0xff] %v2219
        %s2364 = sand.u32 %s142, 1
        %s2365 = scalar_lea.sflag [#allocation4], %s2364
        %s2366 = sand.u32 %s142, 1
        %s2367 = smul.addr %s2366, 1152
        %s2368 = scalar_lea.vmem [#allocation10], %s2367
        // Predicated region
        $region57: #{tpu_custom_call.1} parent=39 // pred_check
          %p2369 = pneg %p152
        $region58: #{tpu_custom_call.1} parent=39 // pred_check_branch
          %2371 = sbr.rel (%p2369) target = $region60
        $region59: #{tpu_custom_call.1} parent=39 // pred_region
          %s2372 = smul.u32 2, %s24
          %s2374 = ssub.s32 18432, 18432
          %2375 = vsyncadd %s2365, %s2374
          %s2376 = smul.addr %s2372, 72
          %s2377 = smul.addr %s2376, 128
          %s2378 = scalar_lea.hbm %s5, %s2377
          %s2379 = sshll.u32 %s2368, 4
          %s2380 = int_to_ptr.vmem [resolvable:$true] %s2379
          %2385 = dma.vmem_to_hbm [thread:$0]  %s2380, 18432, %s2378, %s2365, 2304, 2304, 144
        $region60: #{tpu_custom_call.1} parent=39 // pred_fallthru
          _
      $region40: #{tpu_custom_call.1} parent=5 // pred_fallthru
        _
      %p2386 = scmp.le.s32.totalorder 2, %s19
      // Predicated region
      $region61: #{tpu_custom_call.1} parent=5 // pred_check
        %p2387 = pneg %p2386
      $region62: #{tpu_custom_call.1} parent=5 // pred_check_branch
        %2389 = sbr.rel (%p2387) target = $region64
      $region63: #{tpu_custom_call.1} parent=5 // pred_region
        %s2390 = ssub.s32 %s19, 2
        // Predicated region
        $region65: #{tpu_custom_call.1} parent=63 // pred_check
          %p2391 = pneg %p158
        $region66: #{tpu_custom_call.1} parent=63 // pred_check_branch
          %2393 = sbr.rel (%p2391) target = $region68
        $region67: #{tpu_custom_call.1} parent=63 // pred_region
          %s2394 = sand.u32 %s143, 1
          %s2395 = scalar_lea.sflag [#allocation4], %s2394
          %s2396 = sand.u32 %s143, 1
          %s2397 = smul.addr %s2396, 1152
          %s2398 = scalar_lea.vmem [#allocation10], %s2397
          %2399 = dma.done %s2395, 18432
        $region68: #{tpu_custom_call.1} parent=63 // pred_fallthru
          _
      $region64: #{tpu_custom_call.1} parent=5 // pred_fallthru
        _
    $region6: #{tpu_custom_call.1} parent=1 // loop_footer
      %s23 = sadd.s32 1, %s19
    $region7: #{tpu_custom_call.1} parent=1 // loop_footer_branch
      %18 = sbr.rel target = $region3
    $region8: #{tpu_custom_call.1} parent=1 // loop_exit
      _
    %2400 = vsyncpa [#allocation3], 1
    %s2401 = scalar_lea.sflag [#allocation3], 1
    %2402 = vsyncpa %s2401, 1
    %2403 = vsyncpa [#allocation6], 1
    %2404 = vsyncpa [#allocation9], 1
    %2405 = vsyncpa [#allocation4], 1
    %s2406 = scalar_lea.sflag [#allocation4], 1
    %2407 = vsyncpa %s2406, 1

</llo_original>
